<compile_context>
chip_gen: v6e
topology: v6e:2x2x1
jax: 0.10.0
libtpu: 0.0.40
codegen_flags: <defaults>
</compile_context>

<pallas_src>
import functools

import jax
import jax.numpy as jnp
from jax.experimental import pallas as pl
from jax.experimental.pallas import tpu as pltpu


def _round_up(a, b):
    return (a + b - 1) // b * b


def _swiglu_ffn_kernel(x_ref, w13_ref, w2t_ref, o_ref, acc_ref, *, th):
    # grid = (token_tiles, hidden_tiles); hidden axis j is the reduction axis
    # and is placed last.  o_ref's block is resident across j (accumulator).
    j = pl.program_id(1)

    @pl.when(j == 0)
    def _():
        acc_ref[...] = jnp.zeros_like(acc_ref)

    x = x_ref[...]                                                   # (tm, D)
    # Fused gate/up projection: block j of w13 is [w1^T block j | w3^T block j],
    # so one MXU pass yields both h1 and h3.
    h = jnp.dot(x, w13_ref[...], preferred_element_type=jnp.float32)  # (tm, 2*th)
    h1 = h[:, :th]
    h3 = h[:, th:]
    g = (h1 * jax.nn.sigmoid(h1)) * h3            # SiLU gate * value, fp32 math
    acc_ref[...] += jnp.dot(g.astype(w2t_ref.dtype), w2t_ref[...],
                            preferred_element_type=jnp.float32)

    @pl.when(j == pl.num_programs(1) - 1)
    def _():
        o_ref[...] = acc_ref[...].astype(o_ref.dtype)


def prepare_ffn_weights(w1, w2, w3, *, th=256, param_dtype=None):
    """Prepare torch-layout weights once, outside the hot path.

    w1, w3: (H, D) (out_features, in_features);  w2: (D, H).
    Returns (w13, w2t):
      w13: (D, 2*Hp) with hidden block j occupying columns [2*j*th, 2*(j+1)*th)
           as [w1^T block j | w3^T block j]   (Hp = H rounded up to th)
      w2t: (Hp, D) zero-padded down-projection (padded rows contribute 0).
    """
    H, D = w1.shape
    Hp = _round_up(H, th)
    dt = param_dtype if param_dtype is not None else w1.dtype
    w1t = jnp.pad(w1.T.astype(dt), ((0, 0), (0, Hp - H)))   # (D, Hp)
    w3t = jnp.pad(w3.T.astype(dt), ((0, 0), (0, Hp - H)))   # (D, Hp)
    w2t = jnp.pad(w2.T.astype(dt), ((0, Hp - H), (0, 0)))   # (Hp, D)
    nb = Hp // th
    w13 = jnp.concatenate(
        [w1t.reshape(D, nb, th), w3t.reshape(D, nb, th)], axis=-1
    ).reshape(D, 2 * Hp)
    return w13, w2t


def feedforward_prepared(x, w13, w2t, *, tm=256, th=256):
    """x: (B, T, D); w13/w2t from prepare_ffn_weights (same th)."""
    B, T, D = x.shape
    M = B * T
    Hp = w2t.shape[0]
    assert w13.shape == (D, 2 * Hp)
    assert Hp % th == 0 and th % 128 == 0
    assert D % 128 == 0, "n_embd should be a multiple of 128 for lane density"

    # Token tile: as large as possible (MXU row utilization + weight reuse),
    # clamped for tiny M; pad the token axis so the grid divides evenly.
    tm = min(tm, _round_up(M, 8))
    Mp = _round_up(M, tm)

    x2 = x.reshape(M, D).astype(w13.dtype)
    if Mp != M:
        x2 = jnp.pad(x2, ((0, Mp - M), (0, 0)))  # zero rows -> zero outputs

    grid = (Mp // tm, Hp // th)

    in_b = jnp.dtype(w13.dtype).itemsize
    out_b = jnp.dtype(x.dtype).itemsize
    # double-buffered input/output tiles + resident fp32 accumulator
    vmem_bytes = (2 * tm * D * in_b            # x tile
                  + 2 * D * (2 * th) * in_b    # fused w1/w3 tile
                  + 2 * th * D * in_b          # w2 tile
                  + 2 * tm * D * out_b         # output tile
                  + tm * D * 4)                # fp32 accumulator
    vmem_limit = min(max(int(vmem_bytes * 1.25), 16 * 1024 * 1024),
                     64 * 1024 * 1024)         # stay under v7x physical VMEM

    flops = 2 * Mp * D * (2 * Hp) + 2 * Mp * Hp * D
    bytes_accessed = (x2.size * in_b + Mp * D * out_b
                      + grid[0] * (w13.size + w2t.size) * in_b)

    out = pl.pallas_call(
        functools.partial(_swiglu_ffn_kernel, th=th),
        out_shape=jax.ShapeDtypeStruct((Mp, D), x.dtype),
        grid_spec=pltpu.PrefetchScalarGridSpec(
            num_scalar_prefetch=0,
            grid=grid,
            in_specs=[
                pl.BlockSpec((tm, D), lambda i, j: (i, 0)),       # token tile
                pl.BlockSpec((D, 2 * th), lambda i, j: (0, j)),   # [w1^T|w3^T] blk
                pl.BlockSpec((th, D), lambda i, j: (j, 0)),       # w2^T block
            ],
            out_specs=pl.BlockSpec((tm, D), lambda i, j: (i, 0)),
            scratch_shapes=[pltpu.VMEM((tm, D), jnp.float32)],
        ),
        compiler_params=pltpu.CompilerParams(
            dimension_semantics=("parallel", "arbitrary"),
            vmem_limit_bytes=vmem_limit),
        cost_estimate=pl.CostEstimate(
            flops=int(flops),
            transcendentals=int(Mp * Hp),
            bytes_accessed=int(bytes_accessed)),
    )(x2, w13, w2t)

    if Mp != M:
        out = out[:M]
    return out.reshape(B, T, D)


def feedforward(x, w1, w2, w3, *, tm=256, th=256, param_dtype=None):
    """Convenience wrapper taking torch-layout weights.

    In a real model call prepare_ffn_weights() once at load time and reuse the
    result; it is folded in here only so this script is self-contained.
    Pass param_dtype=jnp.bfloat16 on v6e/v7x for ~2x MXU rate (fp32 accum kept).
    """
    w13, w2t = prepare_ffn_weights(w1, w2, w3, th=th, param_dtype=param_dtype)
    return feedforward_prepared(x, w13, w2t, tm=tm, th=th)


def feedforward_ref(x, w1, w2, w3):
    h = x @ w1.T
    g = h * jax.nn.sigmoid(h)
    return (g * (x @ w3.T)) @ w2.T


if __name__ == "__main__":
    # Shapes consistent with ModelConfig defaults (n_embd=512, n_hidden=1408),
    # small batch/seq for the smoke test.  H=1408 is not a multiple of th=256,
    # which also exercises the hidden-dim zero-padding path.
    B, T, D, H = 2, 16, 512, 1408
    key = jax.random.PRNGKey(0)
    kx, k1, k2, k3 = jax.random.split(key, 4)

    x = jax.random.normal(kx, (B, T, D), dtype=jnp.float32)
    # Deterministic "Linear" weights, torch layout (out_features, in_features).
    w1 = jax.random.normal(k1, (H, D), dtype=jnp.float32) * (1.0 / D ** 0.5)
    w2 = jax.random.normal(k2, (D, H), dtype=jnp.float32) * (1.0 / H ** 0.5)
    w3 = jax.random.normal(k3, (H, D), dtype=jnp.float32) * (1.0 / D ** 0.5)

    y = feedforward(x, w1, w2, w3)
    y = jax.block_until_ready(y)

    y_ref = feedforward_ref(x, w1, w2, w3)
    assert y.shape == (B, T, D)
    assert jnp.allclose(y, y_ref, atol=2e-3, rtol=2e-3), float(
        jnp.max(jnp.abs(y - y_ref)))
    print("KERNEL_OK")
</pallas_src>

<mosaic_0001>
module attributes {stable_mosaic.version = 11 : i64} {
  func.func @_swiglu_ffn_kernel(%arg0: i32, %arg1: i32, %arg2: memref<32x512xf32, #tpu.memory_space<vmem>>, %arg3: memref<512x512xf32, #tpu.memory_space<vmem>>, %arg4: memref<256x512xf32, #tpu.memory_space<vmem>>, %arg5: memref<32x512xf32, #tpu.memory_space<vmem>>, %arg6: memref<32x512xf32, #tpu.memory_space<vmem>>) attributes {dimension_semantics = [#tpu.dimension_semantics<parallel>, #tpu.dimension_semantics<arbitrary>], iteration_bounds = array<i64: 1, 6>, scalar_prefetch = 0 : i64, scratch_operands = 1 : i64, tpu.core_type = #tpu.core_type<tc>, window_params = [{transform_indices = @transform_0, window_bounds = array<i64: 32, 512>}, {transform_indices = @transform_1, window_bounds = array<i64: 512, 512>}, {transform_indices = @transform_2, window_bounds = array<i64: 256, 512>}, {transform_indices = @transform_3, window_bounds = array<i64: 32, 512>}]} {
    %c0_i32 = arith.constant 0 : i32
    %0 = arith.cmpi eq, %arg1, %c0_i32 : i32
    %1 = arith.extui %0 : i1 to i32
    %c0_i32_0 = arith.constant 0 : i32
    %2 = arith.cmpi ne, %1, %c0_i32_0 : i32
    scf.if %2 {
      %cst_13 = arith.constant 0.000000e+00 : f32
      %23 = vector.broadcast %cst_13 : f32 to vector<32x512xf32>
      %c0_14 = arith.constant 0 : index
      %c0_15 = arith.constant 0 : index
      %24 = vector.load %arg6[%c0_14, %c0_15] : memref<32x512xf32, #tpu.memory_space<vmem>>, vector<32x512xf32>
      tpu.vector_store %arg6[%c0_14, %c0_15], %23 {strides = array<i32>} : memref<32x512xf32, #tpu.memory_space<vmem>>, vector<32x512xf32>,
    } else {
    }
    %c0 = arith.constant 0 : index
    %c0_1 = arith.constant 0 : index
    %3 = vector.load %arg2[%c0, %c0_1] : memref<32x512xf32, #tpu.memory_space<vmem>>, vector<32x512xf32>
    %c0_2 = arith.constant 0 : index
    %c0_3 = arith.constant 0 : index
    %4 = vector.load %arg3[%c0_2, %c0_3] : memref<512x512xf32, #tpu.memory_space<vmem>>, vector<512x512xf32>
    %cst = arith.constant dense<0.000000e+00> : vector<32x512xf32>
    %5 = tpu.matmul %3, %4, %cst {dimension_numbers = #tpu.dot_dimension_numbers<[1], [0], [0], [1], [0, 0, 1, 1], [], []>} : vector<32x512xf32>, vector<512x512xf32>, vector<32x512xf32> -> vector<32x512xf32>
    %6 = vector.extract_strided_slice %5 {offsets = [0, 0], sizes = [32, 256], strides = [1, 1]} : vector<32x512xf32> to vector<32x256xf32>
    %7 = vector.extract_strided_slice %5 {offsets = [0, 256], sizes = [32, 256], strides = [1, 1]} : vector<32x512xf32> to vector<32x256xf32>
    %8 = arith.negf %6 : vector<32x256xf32>
    %9 = math.exp %8 : vector<32x256xf32>
    %cst_4 = arith.constant 1.000000e+00 : f32
    %10 = vector.broadcast %cst_4 : f32 to vector<32x256xf32>
    %11 = arith.addf %10, %9 : vector<32x256xf32>
    %12 = arith.divf %10, %11 : vector<32x256xf32>
    %13 = arith.mulf %6, %12 : vector<32x256xf32>
    %14 = arith.mulf %13, %7 : vector<32x256xf32>
    %c0_5 = arith.constant 0 : index
    %c0_6 = arith.constant 0 : index
    %15 = vector.load %arg6[%c0_5, %c0_6] : memref<32x512xf32, #tpu.memory_space<vmem>>, vector<32x512xf32>
    %c0_7 = arith.constant 0 : index
    %c0_8 = arith.constant 0 : index
    %16 = vector.load %arg4[%c0_7, %c0_8] : memref<256x512xf32, #tpu.memory_space<vmem>>, vector<256x512xf32>
    %cst_9 = arith.constant dense<0.000000e+00> : vector<32x512xf32>
    %17 = tpu.matmul %14, %16, %cst_9 {dimension_numbers = #tpu.dot_dimension_numbers<[1], [0], [0], [1], [0, 0, 1, 1], [], []>} : vector<32x256xf32>, vector<256x512xf32>, vector<32x512xf32> -> vector<32x512xf32>
    %18 = arith.addf %15, %17 : vector<32x512xf32>
    %c0_10 = arith.constant 0 : index
    %c0_11 = arith.constant 0 : index
    %19 = vector.load %arg6[%c0_10, %c0_11] : memref<32x512xf32, #tpu.memory_space<vmem>>, vector<32x512xf32>
    tpu.vector_store %arg6[%c0_10, %c0_11], %18 {strides = array<i32>} : memref<32x512xf32, #tpu.memory_space<vmem>>, vector<32x512xf32>,
    %c5_i32 = arith.constant 5 : i32
    %20 = arith.cmpi eq, %arg1, %c5_i32 : i32
    %21 = arith.extui %20 : i1 to i32
    %c0_i32_12 = arith.constant 0 : i32
    %22 = arith.cmpi ne, %21, %c0_i32_12 : i32
    scf.if %22 {
      %c0_13 = arith.constant 0 : index
      %c0_14 = arith.constant 0 : index
      %23 = vector.load %arg6[%c0_13, %c0_14] : memref<32x512xf32, #tpu.memory_space<vmem>>, vector<32x512xf32>
      %c0_15 = arith.constant 0 : index
      %c0_16 = arith.constant 0 : index
      %24 = vector.load %arg5[%c0_15, %c0_16] : memref<32x512xf32, #tpu.memory_space<vmem>>, vector<32x512xf32>
      tpu.vector_store %arg5[%c0_15, %c0_16], %23 {strides = array<i32>} : memref<32x512xf32, #tpu.memory_space<vmem>>, vector<32x512xf32>,
    } else {
    }
    return
  }
  func.func @transform_0(%arg0: i32, %arg1: i32) -> (i32, i32) {
    %c0_i32 = arith.constant 0 : i32
    %c0_i32_0 = arith.constant 0 : i32
    return %arg0, %c0_i32 : i32, i32
  }
  func.func @transform_1(%arg0: i32, %arg1: i32) -> (i32, i32) {
    %c0_i32 = arith.constant 0 : i32
    %c0_i32_0 = arith.constant 0 : i32
    return %c0_i32, %arg1 : i32, i32
  }
  func.func @transform_2(%arg0: i32, %arg1: i32) -> (i32, i32) {
    %c0_i32 = arith.constant 0 : i32
    %c0_i32_0 = arith.constant 0 : i32
    return %arg1, %c0_i32 : i32, i32
  }
  func.func @transform_3(%arg0: i32, %arg1: i32) -> (i32, i32) {
    %c0_i32 = arith.constant 0 : i32
    %c0_i32_0 = arith.constant 0 : i32
    return %arg0, %c0_i32 : i32, i32
  }
}

</mosaic_0001>

<llo_original>
// kernel: tpu_custom_call.1
$region0: #{tpu_custom_call.1}
  #allocation0 [shape = 'u32[]', space=smem, size = 0x4, offset = 0x4, fixed_abs, tag = 'smem constant byte address 0x4 - core index']
  #allocation1 [shape = 'u32[144,128]{1,0:T(1,128)}', space=vmem, size = 0x12000, scoped, tag = 'internal scratch']
  #allocation2 [shape = 'f32[32,512]{1,0:T(8,128)}', space=vmem, size = 0x10000, scoped, tag = 'scratch operand']
  %s0 = inlined_call_operand.hbm [shape: f32[32,512], index: 0, kind: input, shape index: {}]
  %s1 = inlined_call_operand.hbm [shape: f32[512,3072], index: 1, kind: input, shape index: {}]
  %s2 = inlined_call_operand.hbm [shape: f32[1536,512], index: 2, kind: input, shape index: {}]
  %s3 = inlined_call_operand.hbm [shape: f32[32,512], index: 3, kind: output, shape index: {}]
  %s4 = sld [smem:[#allocation0]]
  $region65: #{tpu_custom_call.1} parent=0
    _
  %s6 = ssub.s32 1, %s4
  %s7 = scalar_select 0, %s6, %s4
  $region1: #{tpu_custom_call.1} parent=0
    #allocation3 [shape = 'u8[65536]{0}', space=vmem, size = 0x10000, scoped, tag = 'input window, operand 0, single buffered']
    #allocation4 [shape = 's32[2]{0}', space=sflag, size = 0x8, scoped, tag = 'scoped memory for tpu_custom_call.1']
    #allocation5 [shape = 's32[2]{0}', space=sflag, size = 0x8, scoped, tag = 'scoped memory for tpu_custom_call.1']
    #allocation6 [shape = 'u8[2097152]{0}', space=vmem, size = 0x200000, scoped, tag = 'input window, operand 1']
    #allocation7 [shape = 's32[2]{0}', space=sflag, size = 0x8, scoped, tag = 'scoped memory for tpu_custom_call.1']
    #allocation8 [shape = 'u8[1048576]{0}', space=vmem, size = 0x100000, scoped, tag = 'input window, operand 2']
    #allocation9 [shape = 'u8[65536]{0}', space=vmem, size = 0x10000, scoped, tag = 'output window, operand 0, single buffered']
    %8 = vsyncpa [#allocation4], 0
    %9 = vsyncpa [#allocation7], 0
    %s10 = scalar_lea.sflag [#allocation7], 1
    %11 = vsyncpa %s10, 0
    %12 = vsyncpa [#allocation5], 0
    loop: start=0, step=1, limit=8
    $region2: #{tpu_custom_call.1} parent=1 // loop_pre_header
      _
    $region3: #{tpu_custom_call.1} parent=1 // loop_header
      %s14 = sphi 0, %s18
      %p15 = scmp.ge.s32.totalorder %s14, 8
      %s21 = sphi 0, %s33
      %s22 = sphi 0, %s29
      %s23 = sphi 0, %s21
      %s24 = sphi 0, %s22
      %s25 = sphi 0, %s23
      %s26 = sphi 0, %s24
      %s36 = sphi 0, %s38
      %s39 = sphi 0, %s36
      %s40 = sphi 0, %s39
      %s56 = sphi 0, %s40
      %s62 = sphi 0, %s64
      %s65 = sphi 0, %s62
      %s66 = sphi 0, %s65
      %s82 = sphi 0, %s66
      %s88 = sphi 0, %s90
      %s91 = sphi 0, %s88
      %s92 = sphi 0, %s91
      %s108 = sphi 0, %s92
      %s114 = sphi 0, %s116
      %s117 = sphi 0, %s114
      %s118 = sphi 0, %s117
      %s134 = sphi 0, %s118
    $region4: #{tpu_custom_call.1} parent=1 // loop_header_branch
      %17 = sbr.rel (%p15) target = $region8
    $region5: #{tpu_custom_call.1} parent=1 // loop_body
      %s19 = ssub.s32 %s14, 1
      %s20 = ssub.s32 %s14, 2
      %s27 = sadd.s32 1, %s22
      %p28 = scmp.ge.s32.totalorder %s27, 6
      %s29 = scalar_select %p28, 0, %s27
      %s30 = sadd.s32 1, %s21
      %s31 = scalar_select %p28, %s30, %s21
      %p32 = scmp.ge.s32.totalorder %s31, 1
      %s33 = scalar_select %p32, 0, %s31
      %s34 = ssub.s32 %s21, %s33
      %p35 = scmp.eq.s32.totalorder %s34, 0
      %s37 = sadd.s32 %s36, 1
      %s38 = scalar_select %p35, %s36, %s37
      %p41 = pneg %p35
      %p42 = scmp.eq.s32.totalorder %s14, 5
      %p43 = por %p41, %p42
      %p44 = scmp.ne.s32.totalorder %s36, %s39
      %p45 = scmp.eq.s32.totalorder %s14, 0
      %p46 = por %p44, %p45
      %p47 = scmp.ne.s32.totalorder %s36, %s39
      %p48 = scmp.eq.s32.totalorder %s19, 5
      %p49 = por %p47, %p48
      %p50 = scmp.ne.s32.totalorder %s39, %s40
      %p51 = scmp.eq.s32.totalorder %s19, 0
      %p52 = por %p50, %p51
      %p53 = scmp.ne.s32.totalorder %s39, %s40
      %p54 = scmp.eq.s32.totalorder %s20, 5
      %p55 = por %p53, %p54
      %p57 = scmp.ne.s32.totalorder %s40, %s56
      %p58 = scmp.eq.s32.totalorder %s20, 0
      %p59 = por %p57, %p58
      %s60 = ssub.s32 %s22, %s29
      %p61 = scmp.eq.s32.totalorder %s60, 0
      %s63 = sadd.s32 %s62, 1
      %s64 = scalar_select %p61, %s62, %s63
      %p67 = pneg %p61
      %p68 = scmp.eq.s32.totalorder %s14, 5
      %p69 = por %p67, %p68
      %p70 = scmp.ne.s32.totalorder %s62, %s65
      %p71 = scmp.eq.s32.totalorder %s14, 0
      %p72 = por %p70, %p71
      %p73 = scmp.ne.s32.totalorder %s62, %s65
      %p74 = scmp.eq.s32.totalorder %s19, 5
      %p75 = por %p73, %p74
      %p76 = scmp.ne.s32.totalorder %s65, %s66
      %p77 = scmp.eq.s32.totalorder %s19, 0
      %p78 = por %p76, %p77
      %p79 = scmp.ne.s32.totalorder %s65, %s66
      %p80 = scmp.eq.s32.totalorder %s20, 5
      %p81 = por %p79, %p80
      %p83 = scmp.ne.s32.totalorder %s66, %s82
      %p84 = scmp.eq.s32.totalorder %s20, 0
      %p85 = por %p83, %p84
      %s86 = ssub.s32 %s22, %s29
      %p87 = scmp.eq.s32.totalorder %s86, 0
      %s89 = sadd.s32 %s88, 1
      %s90 = scalar_select %p87, %s88, %s89
      %p93 = pneg %p87
      %p94 = scmp.eq.s32.totalorder %s14, 5
      %p95 = por %p93, %p94
      %p96 = scmp.ne.s32.totalorder %s88, %s91
      %p97 = scmp.eq.s32.totalorder %s14, 0
      %p98 = por %p96, %p97
      %p99 = scmp.ne.s32.totalorder %s88, %s91
      %p100 = scmp.eq.s32.totalorder %s19, 5
      %p101 = por %p99, %p100
      %p102 = scmp.ne.s32.totalorder %s91, %s92
      %p103 = scmp.eq.s32.totalorder %s19, 0
      %p104 = por %p102, %p103
      %p105 = scmp.ne.s32.totalorder %s91, %s92
      %p106 = scmp.eq.s32.totalorder %s20, 5
      %p107 = por %p105, %p106
      %p109 = scmp.ne.s32.totalorder %s92, %s108
      %p110 = scmp.eq.s32.totalorder %s20, 0
      %p111 = por %p109, %p110
      %s112 = ssub.s32 %s21, %s33
      %p113 = scmp.eq.s32.totalorder %s112, 0
      %s115 = sadd.s32 %s114, 1
      %s116 = scalar_select %p113, %s114, %s115
      %p119 = pneg %p113
      %p120 = scmp.eq.s32.totalorder %s14, 5
      %p121 = por %p119, %p120
      %p122 = scmp.ne.s32.totalorder %s114, %s117
      %p123 = scmp.eq.s32.totalorder %s14, 0
      %p124 = por %p122, %p123
      %p125 = scmp.ne.s32.totalorder %s114, %s117
      %p126 = scmp.eq.s32.totalorder %s19, 5
      %p127 = por %p125, %p126
      %p128 = scmp.ne.s32.totalorder %s117, %s118
      %p129 = scmp.eq.s32.totalorder %s19, 0
      %p130 = por %p128, %p129
      %p131 = scmp.ne.s32.totalorder %s117, %s118
      %p132 = scmp.eq.s32.totalorder %s20, 5
      %p133 = por %p131, %p132
      %p135 = scmp.ne.s32.totalorder %s118, %s134
      %p136 = scmp.eq.s32.totalorder %s20, 0
      %p137 = por %p135, %p136
      %p138 = scmp.le.s32.totalorder 1, %s14
      %p139 = scmp.lt.s32.totalorder %s14, 7
      %p140 = pnand %p138, %p139
      %p141 = pneg %p140
      // Predicated region
      $region9: #{tpu_custom_call.1} parent=5 // pred_check
        _
      $region10: #{tpu_custom_call.1} parent=5 // pred_check_branch
        %143 = sbr.rel (%p140) target = $region12
      $region11: #{tpu_custom_call.1} parent=5 // pred_region
        %s144 = ssub.s32 %s14, 1
        // Predicated region
        $region13: #{tpu_custom_call.1} parent=11 // pred_check
          %p145 = pneg %p52
        $region14: #{tpu_custom_call.1} parent=11 // pred_check_branch
          %147 = sbr.rel (%p145) target = $region16
        $region15: #{tpu_custom_call.1} parent=11 // pred_region
          %s148 = smul.u32 4, %s23
          %s150 = ssub.s32 2048, 2048
          %151 = vsyncadd [#allocation4], %s150
          %s152 = smul.addr %s148, 4
          %s153 = smul.addr %s152, 128
          %s154 = scalar_lea.hbm %s0, %s153
          %s155 = sshll.u32 [#allocation3], 4
          %s156 = int_to_ptr.vmem [resolvable:$true] %s155
          %161 = dma.hbm_to_vmem [thread:$0]  %s154, 2048, %s156, [#allocation4], 512, 512, 32
        $region16: #{tpu_custom_call.1} parent=11 // pred_fallthru
          _
      $region12: #{tpu_custom_call.1} parent=5 // pred_fallthru
        _
      %p162 = scmp.lt.s32.totalorder %s14, 6
      // Predicated region
      $region17: #{tpu_custom_call.1} parent=5 // pred_check
        %p163 = pneg %p162
      $region18: #{tpu_custom_call.1} parent=5 // pred_check_branch
        %165 = sbr.rel (%p163) target = $region20
      $region19: #{tpu_custom_call.1} parent=5 // pred_region
        // Predicated region
        $region21: #{tpu_custom_call.1} parent=19 // pred_check
          %p166 = pneg %p72
        $region22: #{tpu_custom_call.1} parent=19 // pred_check_branch
          %168 = sbr.rel (%p166) target = $region24
        $region23: #{tpu_custom_call.1} parent=19 // pred_region
          %s169 = sand.u32 %s14, 1
          %s170 = scalar_lea.sflag [#allocation7], %s169
          %s171 = sand.u32 %s62, 1
          %s172 = smul.addr %s171, 2048
          %s173 = scalar_lea.vmem [#allocation6], %s172
          %s174 = smul.u32 4, %s22
          %s176 = ssub.s32 32768, 32768
          %177 = vsyncadd %s170, %s176
          %s178 = smul.addr %s174, 128
          %s179 = scalar_lea.hbm %s1, %s178
          %s180 = sshll.u32 %s173, 4
          %s181 = int_to_ptr.vmem [resolvable:$true] %s180
          %186 = dma.hbm_to_vmem [thread:$0]  %s179, 32768, %s181, %s170, 3072, 512, 32
        $region24: #{tpu_custom_call.1} parent=19 // pred_fallthru
          _
        // Predicated region
        $region25: #{tpu_custom_call.1} parent=19 // pred_check
          %p187 = pneg %p98
        $region26: #{tpu_custom_call.1} parent=19 // pred_check_branch
          %189 = sbr.rel (%p187) target = $region28
        $region27: #{tpu_custom_call.1} parent=19 // pred_region
          %s190 = sand.u32 %s14, 1
          %s191 = scalar_lea.sflag [#allocation7], %s190
          %s192 = sand.u32 %s88, 1
          %s193 = smul.addr %s192, 1024
          %s194 = scalar_lea.vmem [#allocation8], %s193
          %s195 = smul.u32 32, %s22
          %s197 = ssub.s32 16384, 16384
          %198 = vsyncadd %s191, %s197
          %s199 = smul.addr %s195, 4
          %s200 = smul.addr %s199, 128
          %s201 = scalar_lea.hbm %s2, %s200
          %s202 = sshll.u32 %s194, 4
          %s203 = int_to_ptr.vmem [resolvable:$true] %s202
          %208 = dma.hbm_to_vmem [thread:$0]  %s201, 16384, %s203, %s191, 512, 512, 32
        $region28: #{tpu_custom_call.1} parent=19 // pred_fallthru
          _
      $region20: #{tpu_custom_call.1} parent=5 // pred_fallthru
        _
      %p209 = scmp.le.s32.totalorder 1, %s14
      %p210 = scmp.lt.s32.totalorder %s14, 7
      %p211 = pnand %p209, %p210
      %p212 = pneg %p211
      // Predicated region
      $region29: #{tpu_custom_call.1} parent=5 // pred_check
        _
      $region30: #{tpu_custom_call.1} parent=5 // pred_check_branch
        %214 = sbr.rel (%p211) target = $region32
      $region31: #{tpu_custom_call.1} parent=5 // pred_region
        %s215 = ssub.s32 %s14, 1
        // Predicated region
        $region33: #{tpu_custom_call.1} parent=31 // pred_check
          %p216 = pneg %p52
        $region34: #{tpu_custom_call.1} parent=31 // pred_check_branch
          %218 = sbr.rel (%p216) target = $region36
        $region35: #{tpu_custom_call.1} parent=31 // pred_region
          %219 = dma.done [#allocation4], 2048
        $region36: #{tpu_custom_call.1} parent=31 // pred_fallthru
          _
        %s220 = sand.u32 %s19, 1
        %s221 = scalar_lea.sflag [#allocation7], %s220
        %s222 = sand.u32 %s65, 1
        %s223 = smul.addr %s222, 2048
        %s224 = scalar_lea.vmem [#allocation6], %s223
        // Predicated region
        $region37: #{tpu_custom_call.1} parent=31 // pred_check
          %p225 = pneg %p78
        $region38: #{tpu_custom_call.1} parent=31 // pred_check_branch
          %227 = sbr.rel (%p225) target = $region40
        $region39: #{tpu_custom_call.1} parent=31 // pred_region
          %228 = dma.done %s221, 32768
        $region40: #{tpu_custom_call.1} parent=31 // pred_fallthru
          _
        %s229 = sand.u32 %s19, 1
        %s230 = scalar_lea.sflag [#allocation7], %s229
        %s231 = sand.u32 %s91, 1
        %s232 = smul.addr %s231, 1024
        %s233 = scalar_lea.vmem [#allocation8], %s232
        // Predicated region
        $region41: #{tpu_custom_call.1} parent=31 // pred_check
          %p234 = pneg %p104
        $region42: #{tpu_custom_call.1} parent=31 // pred_check_branch
          %236 = sbr.rel (%p234) target = $region44
        $region43: #{tpu_custom_call.1} parent=31 // pred_region
          %237 = dma.done %s230, 16384
        $region44: #{tpu_custom_call.1} parent=31 // pred_fallthru
          _
        %p238 = pneg %p52
        %p239 = pneg %p49
        %s240 = sand.u32 %s19, 1
        %s241 = scalar_lea.sflag [#allocation7], %s240
        %s242 = sand.u32 %s65, 1
        %s243 = smul.addr %s242, 2048
        %s244 = scalar_lea.vmem [#allocation6], %s243
        %p245 = pneg %p78
        %p246 = pneg %p75
        %s247 = sand.u32 %s19, 1
        %s248 = scalar_lea.sflag [#allocation7], %s247
        %s249 = sand.u32 %s91, 1
        %s250 = smul.addr %s249, 1024
        %s251 = scalar_lea.vmem [#allocation8], %s250
        %p252 = pneg %p104
        %p253 = pneg %p101
        %p254 = pneg %p130
        %p255 = pneg %p127
        %s256 = smul.u32 4, %s23
        %s257 = smul.u32 4, %s24
        %s258 = smul.u32 32, %s24
        %s259 = smul.u32 4, %s23
        %p260 = scmp.eq.s32.totalorder %s24, 0
        // Predicated region
        $region45: #{tpu_custom_call.1} parent=31 // pred_check
          %p261 = pneg %p260
        $region46: #{tpu_custom_call.1} parent=31 // pred_check_branch
          %263 = sbr.rel (%p261) target = $region48
        $region47: #{tpu_custom_call.1} parent=31 // pred_region
          %264 = vst [vmem:[#allocation2] sm:$0xff] 0.0
          %265 = vst [vmem:[#allocation2 + $0x8] sm:$0xff] 0.0
          %266 = vst [vmem:[#allocation2 + $0x10] sm:$0xff] 0.0
          %267 = vst [vmem:[#allocation2 + $0x18] sm:$0xff] 0.0
          %268 = vst [vmem:[#allocation2 + $0x20] sm:$0xff] 0.0
          %269 = vst [vmem:[#allocation2 + $0x28] sm:$0xff] 0.0
          %270 = vst [vmem:[#allocation2 + $0x30] sm:$0xff] 0.0
          %271 = vst [vmem:[#allocation2 + $0x38] sm:$0xff] 0.0
          %272 = vst [vmem:[#allocation2 + $0x40] sm:$0xff] 0.0
          %273 = vst [vmem:[#allocation2 + $0x48] sm:$0xff] 0.0
          %274 = vst [vmem:[#allocation2 + $0x50] sm:$0xff] 0.0
          %275 = vst [vmem:[#allocation2 + $0x58] sm:$0xff] 0.0
          %276 = vst [vmem:[#allocation2 + $0x60] sm:$0xff] 0.0
          %277 = vst [vmem:[#allocation2 + $0x68] sm:$0xff] 0.0
          %278 = vst [vmem:[#allocation2 + $0x70] sm:$0xff] 0.0
          %279 = vst [vmem:[#allocation2 + $0x78] sm:$0xff] 0.0
        $region48: #{tpu_custom_call.1} parent=31 // pred_fallthru
          _
        %v280 = vld [vmem:[#allocation3] sm:$0xff]
        %v281 = vld [vmem:[#allocation3 + $0x8] sm:$0xff]
        %v282 = vld [vmem:[#allocation3 + $0x10] sm:$0xff]
        %v283 = vld [vmem:[#allocation3 + $0x18] sm:$0xff]
        %v284 = vld [vmem:[#allocation3 + $0x20] sm:$0xff]
        %v285 = vld [vmem:[#allocation3 + $0x28] sm:$0xff]
        %v286 = vld [vmem:[#allocation3 + $0x30] sm:$0xff]
        %v287 = vld [vmem:[#allocation3 + $0x38] sm:$0xff]
        %v288 = vld [vmem:[#allocation3 + $0x40] sm:$0xff]
        %v289 = vld [vmem:[#allocation3 + $0x48] sm:$0xff]
        %v290 = vld [vmem:[#allocation3 + $0x50] sm:$0xff]
        %v291 = vld [vmem:[#allocation3 + $0x58] sm:$0xff]
        %v292 = vld [vmem:[#allocation3 + $0x60] sm:$0xff]
        %v293 = vld [vmem:[#allocation3 + $0x68] sm:$0xff]
        %v294 = vld [vmem:[#allocation3 + $0x70] sm:$0xff]
        %v295 = vld [vmem:[#allocation3 + $0x78] sm:$0xff]
        %v296 = vld [vmem:[%s224] sm:$0xff]
        %v297 = vld [vmem:[%s224 + $0x8] sm:$0xff]
        %v298 = vld [vmem:[%s224 + $0x10] sm:$0xff]
        %v299 = vld [vmem:[%s224 + $0x18] sm:$0xff]
        %v300 = vld [vmem:[%s224 + $0x20] sm:$0xff]
        %v301 = vld [vmem:[%s224 + $0x28] sm:$0xff]
        %v302 = vld [vmem:[%s224 + $0x30] sm:$0xff]
        %v303 = vld [vmem:[%s224 + $0x38] sm:$0xff]
        %v304 = vld [vmem:[%s224 + $0x40] sm:$0xff]
        %v305 = vld [vmem:[%s224 + $0x48] sm:$0xff]
        %v306 = vld [vmem:[%s224 + $0x50] sm:$0xff]
        %v307 = vld [vmem:[%s224 + $0x58] sm:$0xff]
        %v308 = vld [vmem:[%s224 + $0x60] sm:$0xff]
        %v309 = vld [vmem:[%s224 + $0x68] sm:$0xff]
        %v310 = vld [vmem:[%s224 + $0x70] sm:$0xff]
        %v311 = vld [vmem:[%s224 + $0x78] sm:$0xff]
        %v312 = vld [vmem:[%s224 + $0x80] sm:$0xff]
        %v313 = vld [vmem:[%s224 + $0x88] sm:$0xff]
        %v314 = vld [vmem:[%s224 + $0x90] sm:$0xff]
        %v315 = vld [vmem:[%s224 + $0x98] sm:$0xff]
        %v316 = vld [vmem:[%s224 + $0xa0] sm:$0xff]
        %v317 = vld [vmem:[%s224 + $0xa8] sm:$0xff]
        %v318 = vld [vmem:[%s224 + $0xb0] sm:$0xff]
        %v319 = vld [vmem:[%s224 + $0xb8] sm:$0xff]
        %v320 = vld [vmem:[%s224 + $0xc0] sm:$0xff]
        %v321 = vld [vmem:[%s224 + $0xc8] sm:$0xff]
        %v322 = vld [vmem:[%s224 + $0xd0] sm:$0xff]
        %v323 = vld [vmem:[%s224 + $0xd8] sm:$0xff]
        %v324 = vld [vmem:[%s224 + $0xe0] sm:$0xff]
        %v325 = vld [vmem:[%s224 + $0xe8] sm:$0xff]
        %v326 = vld [vmem:[%s224 + $0xf0] sm:$0xff]
        %v327 = vld [vmem:[%s224 + $0xf8] sm:$0xff]
        %v328 = vld [vmem:[%s224 + $0x100] sm:$0xff]
        %v329 = vld [vmem:[%s224 + $0x108] sm:$0xff]
        %v330 = vld [vmem:[%s224 + $0x110] sm:$0xff]
        %v331 = vld [vmem:[%s224 + $0x118] sm:$0xff]
        %v332 = vld [vmem:[%s224 + $0x120] sm:$0xff]
        %v333 = vld [vmem:[%s224 + $0x128] sm:$0xff]
        %v334 = vld [vmem:[%s224 + $0x130] sm:$0xff]
        %v335 = vld [vmem:[%s224 + $0x138] sm:$0xff]
        %v336 = vld [vmem:[%s224 + $0x140] sm:$0xff]
        %v337 = vld [vmem:[%s224 + $0x148] sm:$0xff]
        %v338 = vld [vmem:[%s224 + $0x150] sm:$0xff]
        %v339 = vld [vmem:[%s224 + $0x158] sm:$0xff]
        %v340 = vld [vmem:[%s224 + $0x160] sm:$0xff]
        %v341 = vld [vmem:[%s224 + $0x168] sm:$0xff]
        %v342 = vld [vmem:[%s224 + $0x170] sm:$0xff]
        %v343 = vld [vmem:[%s224 + $0x178] sm:$0xff]
        %v344 = vld [vmem:[%s224 + $0x180] sm:$0xff]
        %v345 = vld [vmem:[%s224 + $0x188] sm:$0xff]
        %v346 = vld [vmem:[%s224 + $0x190] sm:$0xff]
        %v347 = vld [vmem:[%s224 + $0x198] sm:$0xff]
        %v348 = vld [vmem:[%s224 + $0x1a0] sm:$0xff]
        %v349 = vld [vmem:[%s224 + $0x1a8] sm:$0xff]
        %v350 = vld [vmem:[%s224 + $0x1b0] sm:$0xff]
        %v351 = vld [vmem:[%s224 + $0x1b8] sm:$0xff]
        %v352 = vld [vmem:[%s224 + $0x1c0] sm:$0xff]
        %v353 = vld [vmem:[%s224 + $0x1c8] sm:$0xff]
        %v354 = vld [vmem:[%s224 + $0x1d0] sm:$0xff]
        %v355 = vld [vmem:[%s224 + $0x1d8] sm:$0xff]
        %v356 = vld [vmem:[%s224 + $0x1e0] sm:$0xff]
        %v357 = vld [vmem:[%s224 + $0x1e8] sm:$0xff]
        %v358 = vld [vmem:[%s224 + $0x1f0] sm:$0xff]
        %v359 = vld [vmem:[%s224 + $0x1f8] sm:$0xff]
        %v360 = vld [vmem:[%s224 + $0x200] sm:$0xff]
        %v361 = vld [vmem:[%s224 + $0x208] sm:$0xff]
        %v362 = vld [vmem:[%s224 + $0x210] sm:$0xff]
        %v363 = vld [vmem:[%s224 + $0x218] sm:$0xff]
        %v364 = vld [vmem:[%s224 + $0x220] sm:$0xff]
        %v365 = vld [vmem:[%s224 + $0x228] sm:$0xff]
        %v366 = vld [vmem:[%s224 + $0x230] sm:$0xff]
        %v367 = vld [vmem:[%s224 + $0x238] sm:$0xff]
        %v368 = vld [vmem:[%s224 + $0x240] sm:$0xff]
        %v369 = vld [vmem:[%s224 + $0x248] sm:$0xff]
        %v370 = vld [vmem:[%s224 + $0x250] sm:$0xff]
        %v371 = vld [vmem:[%s224 + $0x258] sm:$0xff]
        %v372 = vld [vmem:[%s224 + $0x260] sm:$0xff]
        %v373 = vld [vmem:[%s224 + $0x268] sm:$0xff]
        %v374 = vld [vmem:[%s224 + $0x270] sm:$0xff]
        %v375 = vld [vmem:[%s224 + $0x278] sm:$0xff]
        %v376 = vld [vmem:[%s224 + $0x280] sm:$0xff]
        %v377 = vld [vmem:[%s224 + $0x288] sm:$0xff]
        %v378 = vld [vmem:[%s224 + $0x290] sm:$0xff]
        %v379 = vld [vmem:[%s224 + $0x298] sm:$0xff]
        %v380 = vld [vmem:[%s224 + $0x2a0] sm:$0xff]
        %v381 = vld [vmem:[%s224 + $0x2a8] sm:$0xff]
        %v382 = vld [vmem:[%s224 + $0x2b0] sm:$0xff]
        %v383 = vld [vmem:[%s224 + $0x2b8] sm:$0xff]
        %v384 = vld [vmem:[%s224 + $0x2c0] sm:$0xff]
        %v385 = vld [vmem:[%s224 + $0x2c8] sm:$0xff]
        %v386 = vld [vmem:[%s224 + $0x2d0] sm:$0xff]
        %v387 = vld [vmem:[%s224 + $0x2d8] sm:$0xff]
        %v388 = vld [vmem:[%s224 + $0x2e0] sm:$0xff]
        %v389 = vld [vmem:[%s224 + $0x2e8] sm:$0xff]
        %v390 = vld [vmem:[%s224 + $0x2f0] sm:$0xff]
        %v391 = vld [vmem:[%s224 + $0x2f8] sm:$0xff]
        %v392 = vld [vmem:[%s224 + $0x300] sm:$0xff]
        %v393 = vld [vmem:[%s224 + $0x308] sm:$0xff]
        %v394 = vld [vmem:[%s224 + $0x310] sm:$0xff]
        %v395 = vld [vmem:[%s224 + $0x318] sm:$0xff]
        %v396 = vld [vmem:[%s224 + $0x320] sm:$0xff]
        %v397 = vld [vmem:[%s224 + $0x328] sm:$0xff]
        %v398 = vld [vmem:[%s224 + $0x330] sm:$0xff]
        %v399 = vld [vmem:[%s224 + $0x338] sm:$0xff]
        %v400 = vld [vmem:[%s224 + $0x340] sm:$0xff]
        %v401 = vld [vmem:[%s224 + $0x348] sm:$0xff]
        %v402 = vld [vmem:[%s224 + $0x350] sm:$0xff]
        %v403 = vld [vmem:[%s224 + $0x358] sm:$0xff]
        %v404 = vld [vmem:[%s224 + $0x360] sm:$0xff]
        %v405 = vld [vmem:[%s224 + $0x368] sm:$0xff]
        %v406 = vld [vmem:[%s224 + $0x370] sm:$0xff]
        %v407 = vld [vmem:[%s224 + $0x378] sm:$0xff]
        %v408 = vld [vmem:[%s224 + $0x380] sm:$0xff]
        %v409 = vld [vmem:[%s224 + $0x388] sm:$0xff]
        %v410 = vld [vmem:[%s224 + $0x390] sm:$0xff]
        %v411 = vld [vmem:[%s224 + $0x398] sm:$0xff]
        %v412 = vld [vmem:[%s224 + $0x3a0] sm:$0xff]
        %v413 = vld [vmem:[%s224 + $0x3a8] sm:$0xff]
        %v414 = vld [vmem:[%s224 + $0x3b0] sm:$0xff]
        %v415 = vld [vmem:[%s224 + $0x3b8] sm:$0xff]
        %v416 = vld [vmem:[%s224 + $0x3c0] sm:$0xff]
        %v417 = vld [vmem:[%s224 + $0x3c8] sm:$0xff]
        %v418 = vld [vmem:[%s224 + $0x3d0] sm:$0xff]
        %v419 = vld [vmem:[%s224 + $0x3d8] sm:$0xff]
        %v420 = vld [vmem:[%s224 + $0x3e0] sm:$0xff]
        %v421 = vld [vmem:[%s224 + $0x3e8] sm:$0xff]
        %v422 = vld [vmem:[%s224 + $0x3f0] sm:$0xff]
        %v423 = vld [vmem:[%s224 + $0x3f8] sm:$0xff]
        %v424 = vld [vmem:[%s224 + $0x400] sm:$0xff]
        %v425 = vld [vmem:[%s224 + $0x408] sm:$0xff]
        %v426 = vld [vmem:[%s224 + $0x410] sm:$0xff]
        %v427 = vld [vmem:[%s224 + $0x418] sm:$0xff]
        %v428 = vld [vmem:[%s224 + $0x420] sm:$0xff]
        %v429 = vld [vmem:[%s224 + $0x428] sm:$0xff]
        %v430 = vld [vmem:[%s224 + $0x430] sm:$0xff]
        %v431 = vld [vmem:[%s224 + $0x438] sm:$0xff]
        %v432 = vld [vmem:[%s224 + $0x440] sm:$0xff]
        %v433 = vld [vmem:[%s224 + $0x448] sm:$0xff]
        %v434 = vld [vmem:[%s224 + $0x450] sm:$0xff]
        %v435 = vld [vmem:[%s224 + $0x458] sm:$0xff]
        %v436 = vld [vmem:[%s224 + $0x460] sm:$0xff]
        %v437 = vld [vmem:[%s224 + $0x468] sm:$0xff]
        %v438 = vld [vmem:[%s224 + $0x470] sm:$0xff]
        %v439 = vld [vmem:[%s224 + $0x478] sm:$0xff]
        %v440 = vld [vmem:[%s224 + $0x480] sm:$0xff]
        %v441 = vld [vmem:[%s224 + $0x488] sm:$0xff]
        %v442 = vld [vmem:[%s224 + $0x490] sm:$0xff]
        %v443 = vld [vmem:[%s224 + $0x498] sm:$0xff]
        %v444 = vld [vmem:[%s224 + $0x4a0] sm:$0xff]
        %v445 = vld [vmem:[%s224 + $0x4a8] sm:$0xff]
        %v446 = vld [vmem:[%s224 + $0x4b0] sm:$0xff]
        %v447 = vld [vmem:[%s224 + $0x4b8] sm:$0xff]
        %v448 = vld [vmem:[%s224 + $0x4c0] sm:$0xff]
        %v449 = vld [vmem:[%s224 + $0x4c8] sm:$0xff]
        %v450 = vld [vmem:[%s224 + $0x4d0] sm:$0xff]
        %v451 = vld [vmem:[%s224 + $0x4d8] sm:$0xff]
        %v452 = vld [vmem:[%s224 + $0x4e0] sm:$0xff]
        %v453 = vld [vmem:[%s224 + $0x4e8] sm:$0xff]
        %v454 = vld [vmem:[%s224 + $0x4f0] sm:$0xff]
        %v455 = vld [vmem:[%s224 + $0x4f8] sm:$0xff]
        %v456 = vld [vmem:[%s224 + $0x500] sm:$0xff]
        %v457 = vld [vmem:[%s224 + $0x508] sm:$0xff]
        %v458 = vld [vmem:[%s224 + $0x510] sm:$0xff]
        %v459 = vld [vmem:[%s224 + $0x518] sm:$0xff]
        %v460 = vld [vmem:[%s224 + $0x520] sm:$0xff]
        %v461 = vld [vmem:[%s224 + $0x528] sm:$0xff]
        %v462 = vld [vmem:[%s224 + $0x530] sm:$0xff]
        %v463 = vld [vmem:[%s224 + $0x538] sm:$0xff]
        %v464 = vld [vmem:[%s224 + $0x540] sm:$0xff]
        %v465 = vld [vmem:[%s224 + $0x548] sm:$0xff]
        %v466 = vld [vmem:[%s224 + $0x550] sm:$0xff]
        %v467 = vld [vmem:[%s224 + $0x558] sm:$0xff]
        %v468 = vld [vmem:[%s224 + $0x560] sm:$0xff]
        %v469 = vld [vmem:[%s224 + $0x568] sm:$0xff]
        %v470 = vld [vmem:[%s224 + $0x570] sm:$0xff]
        %v471 = vld [vmem:[%s224 + $0x578] sm:$0xff]
        %v472 = vld [vmem:[%s224 + $0x580] sm:$0xff]
        %v473 = vld [vmem:[%s224 + $0x588] sm:$0xff]
        %v474 = vld [vmem:[%s224 + $0x590] sm:$0xff]
        %v475 = vld [vmem:[%s224 + $0x598] sm:$0xff]
        %v476 = vld [vmem:[%s224 + $0x5a0] sm:$0xff]
        %v477 = vld [vmem:[%s224 + $0x5a8] sm:$0xff]
        %v478 = vld [vmem:[%s224 + $0x5b0] sm:$0xff]
        %v479 = vld [vmem:[%s224 + $0x5b8] sm:$0xff]
        %v480 = vld [vmem:[%s224 + $0x5c0] sm:$0xff]
        %v481 = vld [vmem:[%s224 + $0x5c8] sm:$0xff]
        %v482 = vld [vmem:[%s224 + $0x5d0] sm:$0xff]
        %v483 = vld [vmem:[%s224 + $0x5d8] sm:$0xff]
        %v484 = vld [vmem:[%s224 + $0x5e0] sm:$0xff]
        %v485 = vld [vmem:[%s224 + $0x5e8] sm:$0xff]
        %v486 = vld [vmem:[%s224 + $0x5f0] sm:$0xff]
        %v487 = vld [vmem:[%s224 + $0x5f8] sm:$0xff]
        %v488 = vld [vmem:[%s224 + $0x600] sm:$0xff]
        %v489 = vld [vmem:[%s224 + $0x608] sm:$0xff]
        %v490 = vld [vmem:[%s224 + $0x610] sm:$0xff]
        %v491 = vld [vmem:[%s224 + $0x618] sm:$0xff]
        %v492 = vld [vmem:[%s224 + $0x620] sm:$0xff]
        %v493 = vld [vmem:[%s224 + $0x628] sm:$0xff]
        %v494 = vld [vmem:[%s224 + $0x630] sm:$0xff]
        %v495 = vld [vmem:[%s224 + $0x638] sm:$0xff]
        %v496 = vld [vmem:[%s224 + $0x640] sm:$0xff]
        %v497 = vld [vmem:[%s224 + $0x648] sm:$0xff]
        %v498 = vld [vmem:[%s224 + $0x650] sm:$0xff]
        %v499 = vld [vmem:[%s224 + $0x658] sm:$0xff]
        %v500 = vld [vmem:[%s224 + $0x660] sm:$0xff]
        %v501 = vld [vmem:[%s224 + $0x668] sm:$0xff]
        %v502 = vld [vmem:[%s224 + $0x670] sm:$0xff]
        %v503 = vld [vmem:[%s224 + $0x678] sm:$0xff]
        %v504 = vld [vmem:[%s224 + $0x680] sm:$0xff]
        %v505 = vld [vmem:[%s224 + $0x688] sm:$0xff]
        %v506 = vld [vmem:[%s224 + $0x690] sm:$0xff]
        %v507 = vld [vmem:[%s224 + $0x698] sm:$0xff]
        %v508 = vld [vmem:[%s224 + $0x6a0] sm:$0xff]
        %v509 = vld [vmem:[%s224 + $0x6a8] sm:$0xff]
        %v510 = vld [vmem:[%s224 + $0x6b0] sm:$0xff]
        %v511 = vld [vmem:[%s224 + $0x6b8] sm:$0xff]
        %v512 = vld [vmem:[%s224 + $0x6c0] sm:$0xff]
        %v513 = vld [vmem:[%s224 + $0x6c8] sm:$0xff]
        %v514 = vld [vmem:[%s224 + $0x6d0] sm:$0xff]
        %v515 = vld [vmem:[%s224 + $0x6d8] sm:$0xff]
        %v516 = vld [vmem:[%s224 + $0x6e0] sm:$0xff]
        %v517 = vld [vmem:[%s224 + $0x6e8] sm:$0xff]
        %v518 = vld [vmem:[%s224 + $0x6f0] sm:$0xff]
        %v519 = vld [vmem:[%s224 + $0x6f8] sm:$0xff]
        %v520 = vld [vmem:[%s224 + $0x700] sm:$0xff]
        %v521 = vld [vmem:[%s224 + $0x708] sm:$0xff]
        %v522 = vld [vmem:[%s224 + $0x710] sm:$0xff]
        %v523 = vld [vmem:[%s224 + $0x718] sm:$0xff]
        %v524 = vld [vmem:[%s224 + $0x720] sm:$0xff]
        %v525 = vld [vmem:[%s224 + $0x728] sm:$0xff]
        %v526 = vld [vmem:[%s224 + $0x730] sm:$0xff]
        %v527 = vld [vmem:[%s224 + $0x738] sm:$0xff]
        %v528 = vld [vmem:[%s224 + $0x740] sm:$0xff]
        %v529 = vld [vmem:[%s224 + $0x748] sm:$0xff]
        %v530 = vld [vmem:[%s224 + $0x750] sm:$0xff]
        %v531 = vld [vmem:[%s224 + $0x758] sm:$0xff]
        %v532 = vld [vmem:[%s224 + $0x760] sm:$0xff]
        %v533 = vld [vmem:[%s224 + $0x768] sm:$0xff]
        %v534 = vld [vmem:[%s224 + $0x770] sm:$0xff]
        %v535 = vld [vmem:[%s224 + $0x778] sm:$0xff]
        %v536 = vld [vmem:[%s224 + $0x780] sm:$0xff]
        %v537 = vld [vmem:[%s224 + $0x788] sm:$0xff]
        %v538 = vld [vmem:[%s224 + $0x790] sm:$0xff]
        %v539 = vld [vmem:[%s224 + $0x798] sm:$0xff]
        %v540 = vld [vmem:[%s224 + $0x7a0] sm:$0xff]
        %v541 = vld [vmem:[%s224 + $0x7a8] sm:$0xff]
        %v542 = vld [vmem:[%s224 + $0x7b0] sm:$0xff]
        %v543 = vld [vmem:[%s224 + $0x7b8] sm:$0xff]
        %v544 = vld [vmem:[%s224 + $0x7c0] sm:$0xff]
        %v545 = vld [vmem:[%s224 + $0x7c8] sm:$0xff]
        %v546 = vld [vmem:[%s224 + $0x7d0] sm:$0xff]
        %v547 = vld [vmem:[%s224 + $0x7d8] sm:$0xff]
        %v548 = vld [vmem:[%s224 + $0x7e0] sm:$0xff]
        %v549 = vld [vmem:[%s224 + $0x7e8] sm:$0xff]
        %v550 = vld [vmem:[%s224 + $0x7f0] sm:$0xff]
        %v551 = vld [vmem:[%s224 + $0x7f8] sm:$0xff]
        %552 = vmatprep.subr.mxu0 %v357
        %553 = vmatpush1.msra.mxu0 %v356
        %554 = vmatprep.subr.mxu0 %v353
        %555 = vmatpush1.msra.mxu0 %v352
        %556 = vmatprep.subr.mxu0 %v349
        %557 = vmatpush1.msra.mxu0 %v348
        %558 = vmatprep.subr.mxu0 %v345
        %559 = vmatpush1.msra.mxu0 %v344
        %560 = vmatprep.subr.mxu0 %v341
        %561 = vmatpush1.msra.mxu0 %v340
        %562 = vmatprep.subr.mxu0 %v337
        %563 = vmatpush1.msra.mxu0 %v336
        %564 = vmatprep.subr.mxu0 %v333
        %565 = vmatpush1.msra.mxu0 %v332
        %566 = vmatprep.subr.mxu0 %v329
        %567 = vmatpush1.msra.mxu0 %v328
        %568 = vmatprep.subr.mxu0 %v325
        %569 = vmatpush1.msra.mxu0 %v324
        %570 = vmatprep.subr.mxu0 %v321
        %571 = vmatpush1.msra.mxu0 %v320
        %572 = vmatprep.subr.mxu0 %v317
        %573 = vmatpush1.msra.mxu0 %v316
        %574 = vmatprep.subr.mxu0 %v313
        %575 = vmatpush1.msra.mxu0 %v312
        %576 = vmatprep.subr.mxu0 %v309
        %577 = vmatpush1.msra.mxu0 %v308
        %578 = vmatprep.subr.mxu0 %v305
        %579 = vmatpush1.msra.mxu0 %v304
        %580 = vmatprep.subr.mxu0 %v301
        %581 = vmatpush1.msra.mxu0 %v300
        %582 = vmatprep.subr.mxu0 %v297
        %583 = vmatpush1.msra.mxu0 %v296
        %584 = vmatprep.subr.mxu0 %v421
        %585 = vmatpush2.msra.mxu0 %v420
        %586 = vmatprep.subr.mxu0 %v417
        %587 = vmatpush2.msra.mxu0 %v416
        %588 = vmatprep.subr.mxu0 %v413
        %589 = vmatpush2.msra.mxu0 %v412
        %590 = vmatprep.subr.mxu0 %v409
        %591 = vmatpush2.msra.mxu0 %v408
        %592 = vmatprep.subr.mxu0 %v405
        %593 = vmatpush2.msra.mxu0 %v404
        %594 = vmatprep.subr.mxu0 %v401
        %595 = vmatpush2.msra.mxu0 %v400
        %596 = vmatprep.subr.mxu0 %v397
        %597 = vmatpush2.msra.mxu0 %v396
        %598 = vmatprep.subr.mxu0 %v393
        %599 = vmatpush2.msra.mxu0 %v392
        %600 = vmatprep.subr.mxu0 %v389
        %601 = vmatpush2.msra.mxu0 %v388
        %602 = vmatprep.subr.mxu0 %v385
        %603 = vmatpush2.msra.mxu0 %v384
        %604 = vmatprep.subr.mxu0 %v381
        %605 = vmatpush2.msra.mxu0 %v380
        %606 = vmatprep.subr.mxu0 %v377
        %607 = vmatpush2.msra.mxu0 %v376
        %608 = vmatprep.subr.mxu0 %v373
        %609 = vmatpush2.msra.mxu0 %v372
        %610 = vmatprep.subr.mxu0 %v369
        %611 = vmatpush2.msra.mxu0 %v368
        %612 = vmatprep.subr.mxu0 %v365
        %613 = vmatpush2.msra.mxu0 %v364
        %614 = vmatprep.subr.mxu0 %v361
        %615 = vmatpush2.msra.mxu0 %v360
        %616 = vmatprep.mubr.f32.mxu0 %v281
        %617 = vmatmul.mubr.f32.gmra.mxu0 %v280
        %v618 = vpop.f32.mrf.mxu0
        %v619 = vadd.f32 0.0, %v618
        %v620 = vpop.f32.mrf.mxu0
        %v621 = vadd.f32 0.0, %v620
        %622 = vmatprep.mubr.f32.mxu0 %v285
        %623 = vmatmul.mubr.f32.gmra.mxu0 %v284
        %v624 = vpop.f32.mrf.mxu0
        %v625 = vadd.f32 0.0, %v624
        %v626 = vpop.f32.mrf.mxu0
        %v627 = vadd.f32 0.0, %v626
        %628 = vmatprep.mubr.f32.mxu0 %v289
        %629 = vmatmul.mubr.f32.gmra.mxu0 %v288
        %v630 = vpop.f32.mrf.mxu0
        %v631 = vadd.f32 0.0, %v630
        %v632 = vpop.f32.mrf.mxu0
        %v633 = vadd.f32 0.0, %v632
        %634 = vmatprep.mubr.f32.mxu0 %v293
        %635 = vmatmul.mubr.f32.gmra.mxu0 %v292
        %v636 = vpop.f32.mrf.mxu0
        %v637 = vadd.f32 0.0, %v636
        %v638 = vpop.f32.mrf.mxu0
        %v639 = vadd.f32 0.0, %v638
        %640 = vdwg.mxu0
        %641 = vmatprep.subr.mxu0 %v485
        %642 = vmatpush1.msra.mxu0 %v484
        %643 = vmatprep.subr.mxu0 %v481
        %644 = vmatpush1.msra.mxu0 %v480
        %645 = vmatprep.subr.mxu0 %v477
        %646 = vmatpush1.msra.mxu0 %v476
        %647 = vmatprep.subr.mxu0 %v473
        %648 = vmatpush1.msra.mxu0 %v472
        %649 = vmatprep.subr.mxu0 %v469
        %650 = vmatpush1.msra.mxu0 %v468
        %651 = vmatprep.subr.mxu0 %v465
        %652 = vmatpush1.msra.mxu0 %v464
        %653 = vmatprep.subr.mxu0 %v461
        %654 = vmatpush1.msra.mxu0 %v460
        %655 = vmatprep.subr.mxu0 %v457
        %656 = vmatpush1.msra.mxu0 %v456
        %657 = vmatprep.subr.mxu0 %v453
        %658 = vmatpush1.msra.mxu0 %v452
        %659 = vmatprep.subr.mxu0 %v449
        %660 = vmatpush1.msra.mxu0 %v448
        %661 = vmatprep.subr.mxu0 %v445
        %662 = vmatpush1.msra.mxu0 %v444
        %663 = vmatprep.subr.mxu0 %v441
        %664 = vmatpush1.msra.mxu0 %v440
        %665 = vmatprep.subr.mxu0 %v437
        %666 = vmatpush1.msra.mxu0 %v436
        %667 = vmatprep.subr.mxu0 %v433
        %668 = vmatpush1.msra.mxu0 %v432
        %669 = vmatprep.subr.mxu0 %v429
        %670 = vmatpush1.msra.mxu0 %v428
        %671 = vmatprep.subr.mxu0 %v425
        %672 = vmatpush1.msra.mxu0 %v424
        %673 = vmatprep.subr.mxu0 %v549
        %674 = vmatpush2.msra.mxu0 %v548
        %675 = vmatprep.subr.mxu0 %v545
        %676 = vmatpush2.msra.mxu0 %v544
        %677 = vmatprep.subr.mxu0 %v541
        %678 = vmatpush2.msra.mxu0 %v540
        %679 = vmatprep.subr.mxu0 %v537
        %680 = vmatpush2.msra.mxu0 %v536
        %681 = vmatprep.subr.mxu0 %v533
        %682 = vmatpush2.msra.mxu0 %v532
        %683 = vmatprep.subr.mxu0 %v529
        %684 = vmatpush2.msra.mxu0 %v528
        %685 = vmatprep.subr.mxu0 %v525
        %686 = vmatpush2.msra.mxu0 %v524
        %687 = vmatprep.subr.mxu0 %v521
        %688 = vmatpush2.msra.mxu0 %v520
        %689 = vmatprep.subr.mxu0 %v517
        %690 = vmatpush2.msra.mxu0 %v516
        %691 = vmatprep.subr.mxu0 %v513
        %692 = vmatpush2.msra.mxu0 %v512
        %693 = vmatprep.subr.mxu0 %v509
        %694 = vmatpush2.msra.mxu0 %v508
        %695 = vmatprep.subr.mxu0 %v505
        %696 = vmatpush2.msra.mxu0 %v504
        %697 = vmatprep.subr.mxu0 %v501
        %698 = vmatpush2.msra.mxu0 %v500
        %699 = vmatprep.subr.mxu0 %v497
        %700 = vmatpush2.msra.mxu0 %v496
        %701 = vmatprep.subr.mxu0 %v493
        %702 = vmatpush2.msra.mxu0 %v492
        %703 = vmatprep.subr.mxu0 %v489
        %704 = vmatpush2.msra.mxu0 %v488
        %705 = vmatprep.mubr.f32.mxu0 %v283
        %706 = vmatmul.mubr.f32.gmra.mxu0 %v282
        %v707 = vpop.f32.mrf.mxu0
        %v708 = vadd.f32 %v619, %v707
        %v709 = vpop.f32.mrf.mxu0
        %v710 = vadd.f32 %v621, %v709
        %711 = vmatprep.mubr.f32.mxu0 %v287
        %712 = vmatmul.mubr.f32.gmra.mxu0 %v286
        %v713 = vpop.f32.mrf.mxu0
        %v714 = vadd.f32 %v625, %v713
        %v715 = vpop.f32.mrf.mxu0
        %v716 = vadd.f32 %v627, %v715
        %717 = vmatprep.mubr.f32.mxu0 %v291
        %718 = vmatmul.mubr.f32.gmra.mxu0 %v290
        %v719 = vpop.f32.mrf.mxu0
        %v720 = vadd.f32 %v631, %v719
        %v721 = vpop.f32.mrf.mxu0
        %v722 = vadd.f32 %v633, %v721
        %723 = vmatprep.mubr.f32.mxu0 %v295
        %724 = vmatmul.mubr.f32.gmra.mxu0 %v294
        %v725 = vpop.f32.mrf.mxu0
        %v726 = vadd.f32 %v637, %v725
        %v727 = vpop.f32.mrf.mxu0
        %v728 = vadd.f32 %v639, %v727
        %729 = vdwg.mxu0
        %730 = vmatprep.subr.mxu0 %v359
        %731 = vmatpush1.msra.mxu0 %v358
        %732 = vmatprep.subr.mxu0 %v355
        %733 = vmatpush1.msra.mxu0 %v354
        %734 = vmatprep.subr.mxu0 %v351
        %735 = vmatpush1.msra.mxu0 %v350
        %736 = vmatprep.subr.mxu0 %v347
        %737 = vmatpush1.msra.mxu0 %v346
        %738 = vmatprep.subr.mxu0 %v343
        %739 = vmatpush1.msra.mxu0 %v342
        %740 = vmatprep.subr.mxu0 %v339
        %741 = vmatpush1.msra.mxu0 %v338
        %742 = vmatprep.subr.mxu0 %v335
        %743 = vmatpush1.msra.mxu0 %v334
        %744 = vmatprep.subr.mxu0 %v331
        %745 = vmatpush1.msra.mxu0 %v330
        %746 = vmatprep.subr.mxu0 %v327
        %747 = vmatpush1.msra.mxu0 %v326
        %748 = vmatprep.subr.mxu0 %v323
        %749 = vmatpush1.msra.mxu0 %v322
        %750 = vmatprep.subr.mxu0 %v319
        %751 = vmatpush1.msra.mxu0 %v318
        %752 = vmatprep.subr.mxu0 %v315
        %753 = vmatpush1.msra.mxu0 %v314
        %754 = vmatprep.subr.mxu0 %v311
        %755 = vmatpush1.msra.mxu0 %v310
        %756 = vmatprep.subr.mxu0 %v307
        %757 = vmatpush1.msra.mxu0 %v306
        %758 = vmatprep.subr.mxu0 %v303
        %759 = vmatpush1.msra.mxu0 %v302
        %760 = vmatprep.subr.mxu0 %v299
        %761 = vmatpush1.msra.mxu0 %v298
        %762 = vmatprep.subr.mxu0 %v423
        %763 = vmatpush2.msra.mxu0 %v422
        %764 = vmatprep.subr.mxu0 %v419
        %765 = vmatpush2.msra.mxu0 %v418
        %766 = vmatprep.subr.mxu0 %v415
        %767 = vmatpush2.msra.mxu0 %v414
        %768 = vmatprep.subr.mxu0 %v411
        %769 = vmatpush2.msra.mxu0 %v410
        %770 = vmatprep.subr.mxu0 %v407
        %771 = vmatpush2.msra.mxu0 %v406
        %772 = vmatprep.subr.mxu0 %v403
        %773 = vmatpush2.msra.mxu0 %v402
        %774 = vmatprep.subr.mxu0 %v399
        %775 = vmatpush2.msra.mxu0 %v398
        %776 = vmatprep.subr.mxu0 %v395
        %777 = vmatpush2.msra.mxu0 %v394
        %778 = vmatprep.subr.mxu0 %v391
        %779 = vmatpush2.msra.mxu0 %v390
        %780 = vmatprep.subr.mxu0 %v387
        %781 = vmatpush2.msra.mxu0 %v386
        %782 = vmatprep.subr.mxu0 %v383
        %783 = vmatpush2.msra.mxu0 %v382
        %784 = vmatprep.subr.mxu0 %v379
        %785 = vmatpush2.msra.mxu0 %v378
        %786 = vmatprep.subr.mxu0 %v375
        %787 = vmatpush2.msra.mxu0 %v374
        %788 = vmatprep.subr.mxu0 %v371
        %789 = vmatpush2.msra.mxu0 %v370
        %790 = vmatprep.subr.mxu0 %v367
        %791 = vmatpush2.msra.mxu0 %v366
        %792 = vmatprep.subr.mxu0 %v363
        %793 = vmatpush2.msra.mxu0 %v362
        %794 = vmatprep.mubr.f32.mxu0 %v281
        %795 = vmatmul.mubr.f32.gmra.mxu0 %v280
        %v796 = vpop.f32.mrf.mxu0
        %v797 = vadd.f32 0.0, %v796
        %v798 = vpop.f32.mrf.mxu0
        %v799 = vadd.f32 0.0, %v798
        %800 = vmatprep.mubr.f32.mxu0 %v285
        %801 = vmatmul.mubr.f32.gmra.mxu0 %v284
        %v802 = vpop.f32.mrf.mxu0
        %v803 = vadd.f32 0.0, %v802
        %v804 = vpop.f32.mrf.mxu0
        %v805 = vadd.f32 0.0, %v804
        %806 = vmatprep.mubr.f32.mxu0 %v289
        %807 = vmatmul.mubr.f32.gmra.mxu0 %v288
        %v808 = vpop.f32.mrf.mxu0
        %v809 = vadd.f32 0.0, %v808
        %v810 = vpop.f32.mrf.mxu0
        %v811 = vadd.f32 0.0, %v810
        %812 = vmatprep.mubr.f32.mxu0 %v293
        %813 = vmatmul.mubr.f32.gmra.mxu0 %v292
        %v814 = vpop.f32.mrf.mxu0
        %v815 = vadd.f32 0.0, %v814
        %v816 = vpop.f32.mrf.mxu0
        %v817 = vadd.f32 0.0, %v816
        %818 = vdwg.mxu0
        %819 = vmatprep.subr.mxu0 %v487
        %820 = vmatpush1.msra.mxu0 %v486
        %821 = vmatprep.subr.mxu0 %v483
        %822 = vmatpush1.msra.mxu0 %v482
        %823 = vmatprep.subr.mxu0 %v479
        %824 = vmatpush1.msra.mxu0 %v478
        %825 = vmatprep.subr.mxu0 %v475
        %826 = vmatpush1.msra.mxu0 %v474
        %827 = vmatprep.subr.mxu0 %v471
        %828 = vmatpush1.msra.mxu0 %v470
        %829 = vmatprep.subr.mxu0 %v467
        %830 = vmatpush1.msra.mxu0 %v466
        %831 = vmatprep.subr.mxu0 %v463
        %832 = vmatpush1.msra.mxu0 %v462
        %833 = vmatprep.subr.mxu0 %v459
        %834 = vmatpush1.msra.mxu0 %v458
        %835 = vmatprep.subr.mxu0 %v455
        %836 = vmatpush1.msra.mxu0 %v454
        %837 = vmatprep.subr.mxu0 %v451
        %838 = vmatpush1.msra.mxu0 %v450
        %839 = vmatprep.subr.mxu0 %v447
        %840 = vmatpush1.msra.mxu0 %v446
        %841 = vmatprep.subr.mxu0 %v443
        %842 = vmatpush1.msra.mxu0 %v442
        %843 = vmatprep.subr.mxu0 %v439
        %844 = vmatpush1.msra.mxu0 %v438
        %845 = vmatprep.subr.mxu0 %v435
        %846 = vmatpush1.msra.mxu0 %v434
        %847 = vmatprep.subr.mxu0 %v431
        %848 = vmatpush1.msra.mxu0 %v430
        %849 = vmatprep.subr.mxu0 %v427
        %850 = vmatpush1.msra.mxu0 %v426
        %851 = vmatprep.subr.mxu0 %v551
        %852 = vmatpush2.msra.mxu0 %v550
        %853 = vmatprep.subr.mxu0 %v547
        %854 = vmatpush2.msra.mxu0 %v546
        %855 = vmatprep.subr.mxu0 %v543
        %856 = vmatpush2.msra.mxu0 %v542
        %857 = vmatprep.subr.mxu0 %v539
        %858 = vmatpush2.msra.mxu0 %v538
        %859 = vmatprep.subr.mxu0 %v535
        %860 = vmatpush2.msra.mxu0 %v534
        %861 = vmatprep.subr.mxu0 %v531
        %862 = vmatpush2.msra.mxu0 %v530
        %863 = vmatprep.subr.mxu0 %v527
        %864 = vmatpush2.msra.mxu0 %v526
        %865 = vmatprep.subr.mxu0 %v523
        %866 = vmatpush2.msra.mxu0 %v522
        %867 = vmatprep.subr.mxu0 %v519
        %868 = vmatpush2.msra.mxu0 %v518
        %869 = vmatprep.subr.mxu0 %v515
        %870 = vmatpush2.msra.mxu0 %v514
        %871 = vmatprep.subr.mxu0 %v511
        %872 = vmatpush2.msra.mxu0 %v510
        %873 = vmatprep.subr.mxu0 %v507
        %874 = vmatpush2.msra.mxu0 %v506
        %875 = vmatprep.subr.mxu0 %v503
        %876 = vmatpush2.msra.mxu0 %v502
        %877 = vmatprep.subr.mxu0 %v499
        %878 = vmatpush2.msra.mxu0 %v498
        %879 = vmatprep.subr.mxu0 %v495
        %880 = vmatpush2.msra.mxu0 %v494
        %881 = vmatprep.subr.mxu0 %v491
        %882 = vmatpush2.msra.mxu0 %v490
        %883 = vmatprep.mubr.f32.mxu0 %v283
        %884 = vmatmul.mubr.f32.gmra.mxu0 %v282
        %v885 = vpop.f32.mrf.mxu0
        %v886 = vadd.f32 %v797, %v885
        %v887 = vpop.f32.mrf.mxu0
        %v888 = vadd.f32 %v799, %v887
        %889 = vmatprep.mubr.f32.mxu0 %v287
        %890 = vmatmul.mubr.f32.gmra.mxu0 %v286
        %v891 = vpop.f32.mrf.mxu0
        %v892 = vadd.f32 %v803, %v891
        %v893 = vpop.f32.mrf.mxu0
        %v894 = vadd.f32 %v805, %v893
        %895 = vmatprep.mubr.f32.mxu0 %v291
        %896 = vmatmul.mubr.f32.gmra.mxu0 %v290
        %v897 = vpop.f32.mrf.mxu0
        %v898 = vadd.f32 %v809, %v897
        %v899 = vpop.f32.mrf.mxu0
        %v900 = vadd.f32 %v811, %v899
        %901 = vmatprep.mubr.f32.mxu0 %v295
        %902 = vmatmul.mubr.f32.gmra.mxu0 %v294
        %v903 = vpop.f32.mrf.mxu0
        %v904 = vadd.f32 %v815, %v903
        %v905 = vpop.f32.mrf.mxu0
        %v906 = vadd.f32 %v817, %v905
        %907 = vdwg.mxu0
        %v908 = vxor.u32 %v708, 2147483648
        %v909 = vxor.u32 %v710, 2147483648
        %v910 = vxor.u32 %v714, 2147483648
        %v911 = vxor.u32 %v716, 2147483648
        %v912 = vxor.u32 %v720, 2147483648
        %v913 = vxor.u32 %v722, 2147483648
        %v914 = vxor.u32 %v726, 2147483648
        %v915 = vxor.u32 %v728, 2147483648
        %v916 = vmul.f32 %v908, 1.442695
        %v917 = vpow.pop %v916
        %v918 = vmul.f32 %v909, 1.442695
        %v919 = vpow.pop %v918
        %v920 = vmul.f32 %v910, 1.442695
        %v921 = vpow.pop %v920
        %v922 = vmul.f32 %v911, 1.442695
        %v923 = vpow.pop %v922
        %v924 = vmul.f32 %v912, 1.442695
        %v925 = vpow.pop %v924
        %v926 = vmul.f32 %v913, 1.442695
        %v927 = vpow.pop %v926
        %v928 = vmul.f32 %v914, 1.442695
        %v929 = vpow.pop %v928
        %v930 = vmul.f32 %v915, 1.442695
        %v931 = vpow.pop %v930
        %v932 = vadd.f32 %v917, 1.0
        %v933 = vadd.f32 %v919, 1.0
        %v934 = vadd.f32 %v921, 1.0
        %v935 = vadd.f32 %v923, 1.0
        %v936 = vadd.f32 %v925, 1.0
        %v937 = vadd.f32 %v927, 1.0
        %v938 = vadd.f32 %v929, 1.0
        %v939 = vadd.f32 %v931, 1.0
        %v940 = vrcp.pop %v932
        %v941 = vmul.f32 1.0, %v940
        %v942 = vrcp.pop %v933
        %v943 = vmul.f32 1.0, %v942
        %v944 = vrcp.pop %v934
        %v945 = vmul.f32 1.0, %v944
        %v946 = vrcp.pop %v935
        %v947 = vmul.f32 1.0, %v946
        %v948 = vrcp.pop %v936
        %v949 = vmul.f32 1.0, %v948
        %v950 = vrcp.pop %v937
        %v951 = vmul.f32 1.0, %v950
        %v952 = vrcp.pop %v938
        %v953 = vmul.f32 1.0, %v952
        %v954 = vrcp.pop %v939
        %v955 = vmul.f32 1.0, %v954
        %v956 = vmul.f32 %v708, %v941
        %v957 = vmul.f32 %v710, %v943
        %v958 = vmul.f32 %v714, %v945
        %v959 = vmul.f32 %v716, %v947
        %v960 = vmul.f32 %v720, %v949
        %v961 = vmul.f32 %v722, %v951
        %v962 = vmul.f32 %v726, %v953
        %v963 = vmul.f32 %v728, %v955
        %v964 = vmul.f32 %v956, %v886
        %v965 = vmul.f32 %v957, %v888
        %v966 = vmul.f32 %v958, %v892
        %v967 = vmul.f32 %v959, %v894
        %v968 = vmul.f32 %v960, %v898
        %v969 = vmul.f32 %v961, %v900
        %v970 = vmul.f32 %v962, %v904
        %v971 = vmul.f32 %v963, %v906
        %v972 = vld [vmem:[#allocation2] sm:$0xff]
        %v973 = vld [vmem:[#allocation2 + $0x8] sm:$0xff]
        %v974 = vld [vmem:[#allocation2 + $0x10] sm:$0xff]
        %v975 = vld [vmem:[#allocation2 + $0x18] sm:$0xff]
        %v976 = vld [vmem:[#allocation2 + $0x20] sm:$0xff]
        %v977 = vld [vmem:[#allocation2 + $0x28] sm:$0xff]
        %v978 = vld [vmem:[#allocation2 + $0x30] sm:$0xff]
        %v979 = vld [vmem:[#allocation2 + $0x38] sm:$0xff]
        %v980 = vld [vmem:[#allocation2 + $0x40] sm:$0xff]
        %v981 = vld [vmem:[#allocation2 + $0x48] sm:$0xff]
        %v982 = vld [vmem:[#allocation2 + $0x50] sm:$0xff]
        %v983 = vld [vmem:[#allocation2 + $0x58] sm:$0xff]
        %v984 = vld [vmem:[#allocation2 + $0x60] sm:$0xff]
        %v985 = vld [vmem:[#allocation2 + $0x68] sm:$0xff]
        %v986 = vld [vmem:[#allocation2 + $0x70] sm:$0xff]
        %v987 = vld [vmem:[#allocation2 + $0x78] sm:$0xff]
        %v988 = vld [vmem:[%s233] sm:$0xff]
        %v989 = vld [vmem:[%s233 + $0x8] sm:$0xff]
        %v990 = vld [vmem:[%s233 + $0x10] sm:$0xff]
        %v991 = vld [vmem:[%s233 + $0x18] sm:$0xff]
        %v992 = vld [vmem:[%s233 + $0x20] sm:$0xff]
        %v993 = vld [vmem:[%s233 + $0x28] sm:$0xff]
        %v994 = vld [vmem:[%s233 + $0x30] sm:$0xff]
        %v995 = vld [vmem:[%s233 + $0x38] sm:$0xff]
        %v996 = vld [vmem:[%s233 + $0x40] sm:$0xff]
        %v997 = vld [vmem:[%s233 + $0x48] sm:$0xff]
        %v998 = vld [vmem:[%s233 + $0x50] sm:$0xff]
        %v999 = vld [vmem:[%s233 + $0x58] sm:$0xff]
        %v1000 = vld [vmem:[%s233 + $0x60] sm:$0xff]
        %v1001 = vld [vmem:[%s233 + $0x68] sm:$0xff]
        %v1002 = vld [vmem:[%s233 + $0x70] sm:$0xff]
        %v1003 = vld [vmem:[%s233 + $0x78] sm:$0xff]
        %v1004 = vld [vmem:[%s233 + $0x80] sm:$0xff]
        %v1005 = vld [vmem:[%s233 + $0x88] sm:$0xff]
        %v1006 = vld [vmem:[%s233 + $0x90] sm:$0xff]
        %v1007 = vld [vmem:[%s233 + $0x98] sm:$0xff]
        %v1008 = vld [vmem:[%s233 + $0xa0] sm:$0xff]
        %v1009 = vld [vmem:[%s233 + $0xa8] sm:$0xff]
        %v1010 = vld [vmem:[%s233 + $0xb0] sm:$0xff]
        %v1011 = vld [vmem:[%s233 + $0xb8] sm:$0xff]
        %v1012 = vld [vmem:[%s233 + $0xc0] sm:$0xff]
        %v1013 = vld [vmem:[%s233 + $0xc8] sm:$0xff]
        %v1014 = vld [vmem:[%s233 + $0xd0] sm:$0xff]
        %v1015 = vld [vmem:[%s233 + $0xd8] sm:$0xff]
        %v1016 = vld [vmem:[%s233 + $0xe0] sm:$0xff]
        %v1017 = vld [vmem:[%s233 + $0xe8] sm:$0xff]
        %v1018 = vld [vmem:[%s233 + $0xf0] sm:$0xff]
        %v1019 = vld [vmem:[%s233 + $0xf8] sm:$0xff]
        %v1020 = vld [vmem:[%s233 + $0x100] sm:$0xff]
        %v1021 = vld [vmem:[%s233 + $0x108] sm:$0xff]
        %v1022 = vld [vmem:[%s233 + $0x110] sm:$0xff]
        %v1023 = vld [vmem:[%s233 + $0x118] sm:$0xff]
        %v1024 = vld [vmem:[%s233 + $0x120] sm:$0xff]
        %v1025 = vld [vmem:[%s233 + $0x128] sm:$0xff]
        %v1026 = vld [vmem:[%s233 + $0x130] sm:$0xff]
        %v1027 = vld [vmem:[%s233 + $0x138] sm:$0xff]
        %v1028 = vld [vmem:[%s233 + $0x140] sm:$0xff]
        %v1029 = vld [vmem:[%s233 + $0x148] sm:$0xff]
        %v1030 = vld [vmem:[%s233 + $0x150] sm:$0xff]
        %v1031 = vld [vmem:[%s233 + $0x158] sm:$0xff]
        %v1032 = vld [vmem:[%s233 + $0x160] sm:$0xff]
        %v1033 = vld [vmem:[%s233 + $0x168] sm:$0xff]
        %v1034 = vld [vmem:[%s233 + $0x170] sm:$0xff]
        %v1035 = vld [vmem:[%s233 + $0x178] sm:$0xff]
        %v1036 = vld [vmem:[%s233 + $0x180] sm:$0xff]
        %v1037 = vld [vmem:[%s233 + $0x188] sm:$0xff]
        %v1038 = vld [vmem:[%s233 + $0x190] sm:$0xff]
        %v1039 = vld [vmem:[%s233 + $0x198] sm:$0xff]
        %v1040 = vld [vmem:[%s233 + $0x1a0] sm:$0xff]
        %v1041 = vld [vmem:[%s233 + $0x1a8] sm:$0xff]
        %v1042 = vld [vmem:[%s233 + $0x1b0] sm:$0xff]
        %v1043 = vld [vmem:[%s233 + $0x1b8] sm:$0xff]
        %v1044 = vld [vmem:[%s233 + $0x1c0] sm:$0xff]
        %v1045 = vld [vmem:[%s233 + $0x1c8] sm:$0xff]
        %v1046 = vld [vmem:[%s233 + $0x1d0] sm:$0xff]
        %v1047 = vld [vmem:[%s233 + $0x1d8] sm:$0xff]
        %v1048 = vld [vmem:[%s233 + $0x1e0] sm:$0xff]
        %v1049 = vld [vmem:[%s233 + $0x1e8] sm:$0xff]
        %v1050 = vld [vmem:[%s233 + $0x1f0] sm:$0xff]
        %v1051 = vld [vmem:[%s233 + $0x1f8] sm:$0xff]
        %v1052 = vld [vmem:[%s233 + $0x200] sm:$0xff]
        %v1053 = vld [vmem:[%s233 + $0x208] sm:$0xff]
        %v1054 = vld [vmem:[%s233 + $0x210] sm:$0xff]
        %v1055 = vld [vmem:[%s233 + $0x218] sm:$0xff]
        %v1056 = vld [vmem:[%s233 + $0x220] sm:$0xff]
        %v1057 = vld [vmem:[%s233 + $0x228] sm:$0xff]
        %v1058 = vld [vmem:[%s233 + $0x230] sm:$0xff]
        %v1059 = vld [vmem:[%s233 + $0x238] sm:$0xff]
        %v1060 = vld [vmem:[%s233 + $0x240] sm:$0xff]
        %v1061 = vld [vmem:[%s233 + $0x248] sm:$0xff]
        %v1062 = vld [vmem:[%s233 + $0x250] sm:$0xff]
        %v1063 = vld [vmem:[%s233 + $0x258] sm:$0xff]
        %v1064 = vld [vmem:[%s233 + $0x260] sm:$0xff]
        %v1065 = vld [vmem:[%s233 + $0x268] sm:$0xff]
        %v1066 = vld [vmem:[%s233 + $0x270] sm:$0xff]
        %v1067 = vld [vmem:[%s233 + $0x278] sm:$0xff]
        %v1068 = vld [vmem:[%s233 + $0x280] sm:$0xff]
        %v1069 = vld [vmem:[%s233 + $0x288] sm:$0xff]
        %v1070 = vld [vmem:[%s233 + $0x290] sm:$0xff]
        %v1071 = vld [vmem:[%s233 + $0x298] sm:$0xff]
        %v1072 = vld [vmem:[%s233 + $0x2a0] sm:$0xff]
        %v1073 = vld [vmem:[%s233 + $0x2a8] sm:$0xff]
        %v1074 = vld [vmem:[%s233 + $0x2b0] sm:$0xff]
        %v1075 = vld [vmem:[%s233 + $0x2b8] sm:$0xff]
        %v1076 = vld [vmem:[%s233 + $0x2c0] sm:$0xff]
        %v1077 = vld [vmem:[%s233 + $0x2c8] sm:$0xff]
        %v1078 = vld [vmem:[%s233 + $0x2d0] sm:$0xff]
        %v1079 = vld [vmem:[%s233 + $0x2d8] sm:$0xff]
        %v1080 = vld [vmem:[%s233 + $0x2e0] sm:$0xff]
        %v1081 = vld [vmem:[%s233 + $0x2e8] sm:$0xff]
        %v1082 = vld [vmem:[%s233 + $0x2f0] sm:$0xff]
        %v1083 = vld [vmem:[%s233 + $0x2f8] sm:$0xff]
        %v1084 = vld [vmem:[%s233 + $0x300] sm:$0xff]
        %v1085 = vld [vmem:[%s233 + $0x308] sm:$0xff]
        %v1086 = vld [vmem:[%s233 + $0x310] sm:$0xff]
        %v1087 = vld [vmem:[%s233 + $0x318] sm:$0xff]
        %v1088 = vld [vmem:[%s233 + $0x320] sm:$0xff]
        %v1089 = vld [vmem:[%s233 + $0x328] sm:$0xff]
        %v1090 = vld [vmem:[%s233 + $0x330] sm:$0xff]
        %v1091 = vld [vmem:[%s233 + $0x338] sm:$0xff]
        %v1092 = vld [vmem:[%s233 + $0x340] sm:$0xff]
        %v1093 = vld [vmem:[%s233 + $0x348] sm:$0xff]
        %v1094 = vld [vmem:[%s233 + $0x350] sm:$0xff]
        %v1095 = vld [vmem:[%s233 + $0x358] sm:$0xff]
        %v1096 = vld [vmem:[%s233 + $0x360] sm:$0xff]
        %v1097 = vld [vmem:[%s233 + $0x368] sm:$0xff]
        %v1098 = vld [vmem:[%s233 + $0x370] sm:$0xff]
        %v1099 = vld [vmem:[%s233 + $0x378] sm:$0xff]
        %v1100 = vld [vmem:[%s233 + $0x380] sm:$0xff]
        %v1101 = vld [vmem:[%s233 + $0x388] sm:$0xff]
        %v1102 = vld [vmem:[%s233 + $0x390] sm:$0xff]
        %v1103 = vld [vmem:[%s233 + $0x398] sm:$0xff]
        %v1104 = vld [vmem:[%s233 + $0x3a0] sm:$0xff]
        %v1105 = vld [vmem:[%s233 + $0x3a8] sm:$0xff]
        %v1106 = vld [vmem:[%s233 + $0x3b0] sm:$0xff]
        %v1107 = vld [vmem:[%s233 + $0x3b8] sm:$0xff]
        %v1108 = vld [vmem:[%s233 + $0x3c0] sm:$0xff]
        %v1109 = vld [vmem:[%s233 + $0x3c8] sm:$0xff]
        %v1110 = vld [vmem:[%s233 + $0x3d0] sm:$0xff]
        %v1111 = vld [vmem:[%s233 + $0x3d8] sm:$0xff]
        %v1112 = vld [vmem:[%s233 + $0x3e0] sm:$0xff]
        %v1113 = vld [vmem:[%s233 + $0x3e8] sm:$0xff]
        %v1114 = vld [vmem:[%s233 + $0x3f0] sm:$0xff]
        %v1115 = vld [vmem:[%s233 + $0x3f8] sm:$0xff]
        %1116 = vmatprep.subr.mxu0 %v1049
        %1117 = vmatpush1.msra.mxu0 %v1048
        %1118 = vmatprep.subr.mxu0 %v1045
        %1119 = vmatpush1.msra.mxu0 %v1044
        %1120 = vmatprep.subr.mxu0 %v1041
        %1121 = vmatpush1.msra.mxu0 %v1040
        %1122 = vmatprep.subr.mxu0 %v1037
        %1123 = vmatpush1.msra.mxu0 %v1036
        %1124 = vmatprep.subr.mxu0 %v1033
        %1125 = vmatpush1.msra.mxu0 %v1032
        %1126 = vmatprep.subr.mxu0 %v1029
        %1127 = vmatpush1.msra.mxu0 %v1028
        %1128 = vmatprep.subr.mxu0 %v1025
        %1129 = vmatpush1.msra.mxu0 %v1024
        %1130 = vmatprep.subr.mxu0 %v1021
        %1131 = vmatpush1.msra.mxu0 %v1020
        %1132 = vmatprep.subr.mxu0 %v1017
        %1133 = vmatpush1.msra.mxu0 %v1016
        %1134 = vmatprep.subr.mxu0 %v1013
        %1135 = vmatpush1.msra.mxu0 %v1012
        %1136 = vmatprep.subr.mxu0 %v1009
        %1137 = vmatpush1.msra.mxu0 %v1008
        %1138 = vmatprep.subr.mxu0 %v1005
        %1139 = vmatpush1.msra.mxu0 %v1004
        %1140 = vmatprep.subr.mxu0 %v1001
        %1141 = vmatpush1.msra.mxu0 %v1000
        %1142 = vmatprep.subr.mxu0 %v997
        %1143 = vmatpush1.msra.mxu0 %v996
        %1144 = vmatprep.subr.mxu0 %v993
        %1145 = vmatpush1.msra.mxu0 %v992
        %1146 = vmatprep.subr.mxu0 %v989
        %1147 = vmatpush1.msra.mxu0 %v988
        %1148 = vmatprep.subr.mxu0 %v1113
        %1149 = vmatpush2.msra.mxu0 %v1112
        %1150 = vmatprep.subr.mxu0 %v1109
        %1151 = vmatpush2.msra.mxu0 %v1108
        %1152 = vmatprep.subr.mxu0 %v1105
        %1153 = vmatpush2.msra.mxu0 %v1104
        %1154 = vmatprep.subr.mxu0 %v1101
        %1155 = vmatpush2.msra.mxu0 %v1100
        %1156 = vmatprep.subr.mxu0 %v1097
        %1157 = vmatpush2.msra.mxu0 %v1096
        %1158 = vmatprep.subr.mxu0 %v1093
        %1159 = vmatpush2.msra.mxu0 %v1092
        %1160 = vmatprep.subr.mxu0 %v1089
        %1161 = vmatpush2.msra.mxu0 %v1088
        %1162 = vmatprep.subr.mxu0 %v1085
        %1163 = vmatpush2.msra.mxu0 %v1084
        %1164 = vmatprep.subr.mxu0 %v1081
        %1165 = vmatpush2.msra.mxu0 %v1080
        %1166 = vmatprep.subr.mxu0 %v1077
        %1167 = vmatpush2.msra.mxu0 %v1076
        %1168 = vmatprep.subr.mxu0 %v1073
        %1169 = vmatpush2.msra.mxu0 %v1072
        %1170 = vmatprep.subr.mxu0 %v1069
        %1171 = vmatpush2.msra.mxu0 %v1068
        %1172 = vmatprep.subr.mxu0 %v1065
        %1173 = vmatpush2.msra.mxu0 %v1064
        %1174 = vmatprep.subr.mxu0 %v1061
        %1175 = vmatpush2.msra.mxu0 %v1060
        %1176 = vmatprep.subr.mxu0 %v1057
        %1177 = vmatpush2.msra.mxu0 %v1056
        %1178 = vmatprep.subr.mxu0 %v1053
        %1179 = vmatpush2.msra.mxu0 %v1052
        %1180 = vmatprep.mubr.f32.mxu0 %v965
        %1181 = vmatmul.mubr.f32.gmra.mxu0 %v964
        %v1182 = vpop.f32.mrf.mxu0
        %v1183 = vadd.f32 0.0, %v1182
        %v1184 = vpop.f32.mrf.mxu0
        %v1185 = vadd.f32 0.0, %v1184
        %1186 = vmatprep.mubr.f32.mxu0 %v967
        %1187 = vmatmul.mubr.f32.gmra.mxu0 %v966
        %v1188 = vpop.f32.mrf.mxu0
        %v1189 = vadd.f32 0.0, %v1188
        %v1190 = vpop.f32.mrf.mxu0
        %v1191 = vadd.f32 0.0, %v1190
        %1192 = vmatprep.mubr.f32.mxu0 %v969
        %1193 = vmatmul.mubr.f32.gmra.mxu0 %v968
        %v1194 = vpop.f32.mrf.mxu0
        %v1195 = vadd.f32 0.0, %v1194
        %v1196 = vpop.f32.mrf.mxu0
        %v1197 = vadd.f32 0.0, %v1196
        %1198 = vmatprep.mubr.f32.mxu0 %v971
        %1199 = vmatmul.mubr.f32.gmra.mxu0 %v970
        %v1200 = vpop.f32.mrf.mxu0
        %v1201 = vadd.f32 0.0, %v1200
        %v1202 = vpop.f32.mrf.mxu0
        %v1203 = vadd.f32 0.0, %v1202
        %1204 = vdwg.mxu0
        %1205 = vmatprep.subr.mxu0 %v1051
        %1206 = vmatpush1.msra.mxu0 %v1050
        %1207 = vmatprep.subr.mxu0 %v1047
        %1208 = vmatpush1.msra.mxu0 %v1046
        %1209 = vmatprep.subr.mxu0 %v1043
        %1210 = vmatpush1.msra.mxu0 %v1042
        %1211 = vmatprep.subr.mxu0 %v1039
        %1212 = vmatpush1.msra.mxu0 %v1038
        %1213 = vmatprep.subr.mxu0 %v1035
        %1214 = vmatpush1.msra.mxu0 %v1034
        %1215 = vmatprep.subr.mxu0 %v1031
        %1216 = vmatpush1.msra.mxu0 %v1030
        %1217 = vmatprep.subr.mxu0 %v1027
        %1218 = vmatpush1.msra.mxu0 %v1026
        %1219 = vmatprep.subr.mxu0 %v1023
        %1220 = vmatpush1.msra.mxu0 %v1022
        %1221 = vmatprep.subr.mxu0 %v1019
        %1222 = vmatpush1.msra.mxu0 %v1018
        %1223 = vmatprep.subr.mxu0 %v1015
        %1224 = vmatpush1.msra.mxu0 %v1014
        %1225 = vmatprep.subr.mxu0 %v1011
        %1226 = vmatpush1.msra.mxu0 %v1010
        %1227 = vmatprep.subr.mxu0 %v1007
        %1228 = vmatpush1.msra.mxu0 %v1006
        %1229 = vmatprep.subr.mxu0 %v1003
        %1230 = vmatpush1.msra.mxu0 %v1002
        %1231 = vmatprep.subr.mxu0 %v999
        %1232 = vmatpush1.msra.mxu0 %v998
        %1233 = vmatprep.subr.mxu0 %v995
        %1234 = vmatpush1.msra.mxu0 %v994
        %1235 = vmatprep.subr.mxu0 %v991
        %1236 = vmatpush1.msra.mxu0 %v990
        %1237 = vmatprep.subr.mxu0 %v1115
        %1238 = vmatpush2.msra.mxu0 %v1114
        %1239 = vmatprep.subr.mxu0 %v1111
        %1240 = vmatpush2.msra.mxu0 %v1110
        %1241 = vmatprep.subr.mxu0 %v1107
        %1242 = vmatpush2.msra.mxu0 %v1106
        %1243 = vmatprep.subr.mxu0 %v1103
        %1244 = vmatpush2.msra.mxu0 %v1102
        %1245 = vmatprep.subr.mxu0 %v1099
        %1246 = vmatpush2.msra.mxu0 %v1098
        %1247 = vmatprep.subr.mxu0 %v1095
        %1248 = vmatpush2.msra.mxu0 %v1094
        %1249 = vmatprep.subr.mxu0 %v1091
        %1250 = vmatpush2.msra.mxu0 %v1090
        %1251 = vmatprep.subr.mxu0 %v1087
        %1252 = vmatpush2.msra.mxu0 %v1086
        %1253 = vmatprep.subr.mxu0 %v1083
        %1254 = vmatpush2.msra.mxu0 %v1082
        %1255 = vmatprep.subr.mxu0 %v1079
        %1256 = vmatpush2.msra.mxu0 %v1078
        %1257 = vmatprep.subr.mxu0 %v1075
        %1258 = vmatpush2.msra.mxu0 %v1074
        %1259 = vmatprep.subr.mxu0 %v1071
        %1260 = vmatpush2.msra.mxu0 %v1070
        %1261 = vmatprep.subr.mxu0 %v1067
        %1262 = vmatpush2.msra.mxu0 %v1066
        %1263 = vmatprep.subr.mxu0 %v1063
        %1264 = vmatpush2.msra.mxu0 %v1062
        %1265 = vmatprep.subr.mxu0 %v1059
        %1266 = vmatpush2.msra.mxu0 %v1058
        %1267 = vmatprep.subr.mxu0 %v1055
        %1268 = vmatpush2.msra.mxu0 %v1054
        %1269 = vmatprep.mubr.f32.mxu0 %v965
        %1270 = vmatmul.mubr.f32.gmra.mxu0 %v964
        %v1271 = vpop.f32.mrf.mxu0
        %v1272 = vadd.f32 0.0, %v1271
        %v1273 = vpop.f32.mrf.mxu0
        %v1274 = vadd.f32 0.0, %v1273
        %1275 = vmatprep.mubr.f32.mxu0 %v967
        %1276 = vmatmul.mubr.f32.gmra.mxu0 %v966
        %v1277 = vpop.f32.mrf.mxu0
        %v1278 = vadd.f32 0.0, %v1277
        %v1279 = vpop.f32.mrf.mxu0
        %v1280 = vadd.f32 0.0, %v1279
        %1281 = vmatprep.mubr.f32.mxu0 %v969
        %1282 = vmatmul.mubr.f32.gmra.mxu0 %v968
        %v1283 = vpop.f32.mrf.mxu0
        %v1284 = vadd.f32 0.0, %v1283
        %v1285 = vpop.f32.mrf.mxu0
        %v1286 = vadd.f32 0.0, %v1285
        %1287 = vmatprep.mubr.f32.mxu0 %v971
        %1288 = vmatmul.mubr.f32.gmra.mxu0 %v970
        %v1289 = vpop.f32.mrf.mxu0
        %v1290 = vadd.f32 0.0, %v1289
        %v1291 = vpop.f32.mrf.mxu0
        %v1292 = vadd.f32 0.0, %v1291
        %1293 = vdwg.mxu0
        %v1294 = vadd.f32 %v972, %v1183
        %v1295 = vadd.f32 %v973, %v1185
        %v1296 = vadd.f32 %v974, %v1272
        %v1297 = vadd.f32 %v975, %v1274
        %v1298 = vadd.f32 %v976, %v1189
        %v1299 = vadd.f32 %v977, %v1191
        %v1300 = vadd.f32 %v978, %v1278
        %v1301 = vadd.f32 %v979, %v1280
        %v1302 = vadd.f32 %v980, %v1195
        %v1303 = vadd.f32 %v981, %v1197
        %v1304 = vadd.f32 %v982, %v1284
        %v1305 = vadd.f32 %v983, %v1286
        %v1306 = vadd.f32 %v984, %v1201
        %v1307 = vadd.f32 %v985, %v1203
        %v1308 = vadd.f32 %v986, %v1290
        %v1309 = vadd.f32 %v987, %v1292
        %1310 = vst [vmem:[#allocation2] sm:$0xff] %v1294
        %1311 = vst [vmem:[#allocation2 + $0x8] sm:$0xff] %v1295
        %1312 = vst [vmem:[#allocation2 + $0x10] sm:$0xff] %v1296
        %1313 = vst [vmem:[#allocation2 + $0x18] sm:$0xff] %v1297
        %1314 = vst [vmem:[#allocation2 + $0x20] sm:$0xff] %v1298
        %1315 = vst [vmem:[#allocation2 + $0x28] sm:$0xff] %v1299
        %1316 = vst [vmem:[#allocation2 + $0x30] sm:$0xff] %v1300
        %1317 = vst [vmem:[#allocation2 + $0x38] sm:$0xff] %v1301
        %1318 = vst [vmem:[#allocation2 + $0x40] sm:$0xff] %v1302
        %1319 = vst [vmem:[#allocation2 + $0x48] sm:$0xff] %v1303
        %1320 = vst [vmem:[#allocation2 + $0x50] sm:$0xff] %v1304
        %1321 = vst [vmem:[#allocation2 + $0x58] sm:$0xff] %v1305
        %1322 = vst [vmem:[#allocation2 + $0x60] sm:$0xff] %v1306
        %1323 = vst [vmem:[#allocation2 + $0x68] sm:$0xff] %v1307
        %1324 = vst [vmem:[#allocation2 + $0x70] sm:$0xff] %v1308
        %1325 = vst [vmem:[#allocation2 + $0x78] sm:$0xff] %v1309
        %p1326 = scmp.eq.s32.totalorder %s24, 5
        // Predicated region
        $region49: #{tpu_custom_call.1} parent=31 // pred_check
          %p1327 = pneg %p1326
        $region50: #{tpu_custom_call.1} parent=31 // pred_check_branch
          %1329 = sbr.rel (%p1327) target = $region52
        $region51: #{tpu_custom_call.1} parent=31 // pred_region
          %v1330 = vld [vmem:[#allocation2] sm:$0xff]
          %v1331 = vld [vmem:[#allocation2 + $0x8] sm:$0xff]
          %v1332 = vld [vmem:[#allocation2 + $0x10] sm:$0xff]
          %v1333 = vld [vmem:[#allocation2 + $0x18] sm:$0xff]
          %v1334 = vld [vmem:[#allocation2 + $0x20] sm:$0xff]
          %v1335 = vld [vmem:[#allocation2 + $0x28] sm:$0xff]
          %v1336 = vld [vmem:[#allocation2 + $0x30] sm:$0xff]
          %v1337 = vld [vmem:[#allocation2 + $0x38] sm:$0xff]
          %v1338 = vld [vmem:[#allocation2 + $0x40] sm:$0xff]
          %v1339 = vld [vmem:[#allocation2 + $0x48] sm:$0xff]
          %v1340 = vld [vmem:[#allocation2 + $0x50] sm:$0xff]
          %v1341 = vld [vmem:[#allocation2 + $0x58] sm:$0xff]
          %v1342 = vld [vmem:[#allocation2 + $0x60] sm:$0xff]
          %v1343 = vld [vmem:[#allocation2 + $0x68] sm:$0xff]
          %v1344 = vld [vmem:[#allocation2 + $0x70] sm:$0xff]
          %v1345 = vld [vmem:[#allocation2 + $0x78] sm:$0xff]
          %1346 = vst [vmem:[#allocation9] sm:$0xff] %v1330
          %1347 = vst [vmem:[#allocation9 + $0x8] sm:$0xff] %v1331
          %1348 = vst [vmem:[#allocation9 + $0x10] sm:$0xff] %v1332
          %1349 = vst [vmem:[#allocation9 + $0x18] sm:$0xff] %v1333
          %1350 = vst [vmem:[#allocation9 + $0x20] sm:$0xff] %v1334
          %1351 = vst [vmem:[#allocation9 + $0x28] sm:$0xff] %v1335
          %1352 = vst [vmem:[#allocation9 + $0x30] sm:$0xff] %v1336
          %1353 = vst [vmem:[#allocation9 + $0x38] sm:$0xff] %v1337
          %1354 = vst [vmem:[#allocation9 + $0x40] sm:$0xff] %v1338
          %1355 = vst [vmem:[#allocation9 + $0x48] sm:$0xff] %v1339
          %1356 = vst [vmem:[#allocation9 + $0x50] sm:$0xff] %v1340
          %1357 = vst [vmem:[#allocation9 + $0x58] sm:$0xff] %v1341
          %1358 = vst [vmem:[#allocation9 + $0x60] sm:$0xff] %v1342
          %1359 = vst [vmem:[#allocation9 + $0x68] sm:$0xff] %v1343
          %1360 = vst [vmem:[#allocation9 + $0x70] sm:$0xff] %v1344
          %1361 = vst [vmem:[#allocation9 + $0x78] sm:$0xff] %v1345
        $region52: #{tpu_custom_call.1} parent=31 // pred_fallthru
          _
        // Predicated region
        $region53: #{tpu_custom_call.1} parent=31 // pred_check
          %p1362 = pneg %p127
        $region54: #{tpu_custom_call.1} parent=31 // pred_check_branch
          %1364 = sbr.rel (%p1362) target = $region56
        $region55: #{tpu_custom_call.1} parent=31 // pred_region
          %s1365 = smul.u32 4, %s23
          %s1367 = ssub.s32 2048, 2048
          %1368 = vsyncadd [#allocation5], %s1367
          %s1369 = smul.addr %s1365, 4
          %s1370 = smul.addr %s1369, 128
          %s1371 = scalar_lea.hbm %s3, %s1370
          %s1372 = sshll.u32 [#allocation9], 4
          %s1373 = int_to_ptr.vmem [resolvable:$true] %s1372
          %1378 = dma.vmem_to_hbm [thread:$0]  %s1373, 2048, %s1371, [#allocation5], 512, 512, 32
        $region56: #{tpu_custom_call.1} parent=31 // pred_fallthru
          _
        // Predicated region
        $region57: #{tpu_custom_call.1} parent=31 // pred_check
          %p1379 = pneg %p127
        $region58: #{tpu_custom_call.1} parent=31 // pred_check_branch
          %1381 = sbr.rel (%p1379) target = $region60
        $region59: #{tpu_custom_call.1} parent=31 // pred_region
          %1382 = dma.done [#allocation5], 2048
        $region60: #{tpu_custom_call.1} parent=31 // pred_fallthru
          _
      $region32: #{tpu_custom_call.1} parent=5 // pred_fallthru
        _
      %p1383 = scmp.le.s32.totalorder 2, %s14
      // Predicated region
      $region61: #{tpu_custom_call.1} parent=5 // pred_check
        %p1384 = pneg %p1383
      $region62: #{tpu_custom_call.1} parent=5 // pred_check_branch
        %1386 = sbr.rel (%p1384) target = $region64
      $region63: #{tpu_custom_call.1} parent=5 // pred_region
        %s1387 = ssub.s32 %s14, 2
      $region64: #{tpu_custom_call.1} parent=5 // pred_fallthru
        _
    $region6: #{tpu_custom_call.1} parent=1 // loop_footer
      %s18 = sadd.s32 1, %s14
    $region7: #{tpu_custom_call.1} parent=1 // loop_footer_branch
      %13 = sbr.rel target = $region3
    $region8: #{tpu_custom_call.1} parent=1 // loop_exit
      _
    %1388 = vsyncpa [#allocation4], 1
    %s1389 = scalar_lea.sflag [#allocation4], 1
    %1390 = vsyncpa %s1389, 1
    %1391 = vsyncpa [#allocation7], 1
    %s1392 = scalar_lea.sflag [#allocation7], 1
    %1393 = vsyncpa %s1392, 1
    %1394 = vsyncpa [#allocation5], 1
    %s1395 = scalar_lea.sflag [#allocation5], 1
    %1396 = vsyncpa %s1395, 1

</llo_original>
